<compile_context>
chip_gen: v7x
topology: tpu7x:2x2x1
jax: 0.10.0
libtpu: 0.0.40
codegen_flags: <defaults>
</compile_context>

<pallas_src>
import functools

import jax
import jax.numpy as jnp
from jax import lax
from jax.experimental import pallas as pl
from jax.experimental.pallas import tpu as pltpu

EPS = 1e-5


def _group_norm(y, gamma, beta, proj, nb, hw, inv_n, eps=EPS):
    """GroupNorm of NB packed samples in (C, nb*hw) layout, per-sample statistics.

    Reduce-then-project: lane-reduce each sample's pixels first (XLU slot), then apply
    the (C, C) group-membership projector to the tiny (C, nb) column of sums.
    gamma/beta are (C, 1) columns; proj[c, c'] = 1 iff c, c' share a group.
    """
    C = y.shape[0]

    def seg_reduce(z):
        if nb == 1:
            return jnp.sum(z, axis=1, keepdims=True)                       # (C, 1)
        cols = [jnp.sum(z[:, s * hw:(s + 1) * hw], axis=1, keepdims=True)
                for s in range(nb)]
        return jnp.concatenate(cols, axis=1)                               # (C, nb)

    def seg_broadcast(col):
        if nb == 1:
            return col                                                     # broadcasts
        parts = [jnp.broadcast_to(col[:, s:s + 1], (C, hw)) for s in range(nb)]
        return jnp.concatenate(parts, axis=1)                              # (C, nb*hw)

    gsum = jnp.dot(proj, seg_reduce(y), preferred_element_type=jnp.float32)
    mean = seg_broadcast(gsum * inv_n)
    d = y - mean
    gvar = jnp.dot(proj, seg_reduce(d * d), preferred_element_type=jnp.float32) * inv_n
    rstd = seg_broadcast(lax.rsqrt(gvar + eps))
    return d * rstd * gamma + beta


def _bottleneck_kernel(x_ref, wcat_ref, w2_ref, w3_ref, vec_ref, pmid_ref, pout_ref,
                       mask_ref, o_ref, patch_ref, *, H, W, NB, Cmid, Cout):
    HW = H * W
    L = NB * HW
    inv_mid = 1.0 / float(HW * 8)          # groups = Cmid // 8  ->  8 channels per group
    inv_out = 1.0 / float(HW * 8)          # groups = Cout // 8

    # Consolidated per-channel column vectors (one input instead of 12 tiny ones).
    # Wrapper order: [b1; bs; g1; be1; b2; g2; be2; b3; g3; be3]
    offset = [0]

    def take(size):
        s = offset[0]
        offset[0] += size
        return vec_ref[pl.ds(s, size), :]

    bcat = take(Cmid + Cout)                # fused conv1 + skip bias
    g1, be1 = take(Cmid), take(Cmid)
    b2, g2, be2 = take(Cmid), take(Cmid), take(Cmid)
    b3, g3, be3 = take(Cout), take(Cout), take(Cout)

    x = x_ref[...]                                                          # (Cin, L)

    # --- conv1 (1x1) and skip conv (1x1) fused into a single matmul over shared x ---
    ycat = jnp.dot(wcat_ref[...], x, preferred_element_type=jnp.float32) + bcat
    y = ycat[:Cmid, :]                                                      # (Cmid, L)
    # Park the skip branch in the output VMEM tile; reload only at the final add.
    o_ref[...] = ycat[Cmid:, :]                                             # (Cout, L)

    # --- GN1 + ReLU ---
    y = _group_norm(y, g1, be1, pmid_ref[...], NB, HW, inv_mid)
    y = jnp.maximum(y, 0.0)

    # --- conv2 (3x3, padding=1): im2col built directly into VMEM scratch via 9 stores.
    #     Boundary masks are precomputed (9, L) inputs; lane roll rides the XLU slot.
    idx = 0
    for ky in range(3):
        for kx in range(3):
            off = (ky - 1) * W + (kx - 1)
            if off == 0:
                patch_ref[pl.ds(idx * Cmid, Cmid), :] = y
            else:
                shifted = pltpu.roll(y, shift=(-off) % L, axis=1)
                patch_ref[pl.ds(idx * Cmid, Cmid), :] = (
                    shifted * mask_ref[pl.ds(idx, 1), :])
            idx += 1

    y = jnp.dot(w2_ref[...], patch_ref[...], preferred_element_type=jnp.float32) + b2

    # --- GN2 + ReLU ---
    y = _group_norm(y, g2, be2, pmid_ref[...], NB, HW, inv_mid)
    y = jnp.maximum(y, 0.0)

    # --- conv3 (1x1) + GN3 ---
    y = jnp.dot(w3_ref[...], y, preferred_element_type=jnp.float32) + b3
    y = _group_norm(y, g3, be3, pout_ref[...], NB, HW, inv_out)

    # --- residual add + ReLU (lane-dense store) ---
    o_ref[...] = jnp.maximum(y + o_ref[...], 0.0)


def _group_projector(c, num_groups):
    ids = jnp.arange(c, dtype=jnp.int32) // (c // num_groups)
    return (ids[:, None] == ids[None, :]).astype(jnp.float32)


def _const_spec(a):
    nd = a.ndim
    return pl.BlockSpec(a.shape, lambda n, _nd=nd: (0,) * _nd)


def conv_bottleneck_forward(x_nchw, params, samples_per_step=1):
    """x_nchw: (N, Cin, H, W) float32 -> (N, Cout, H, W) float32."""
    N, Cin, H, W = x_nchw.shape
    HW = H * W
    Cmid = params['w1'].shape[1]
    Cout = params['w3'].shape[1]
    NB = samples_per_step
    if Cmid % 8 != 0 or Cout % 8 != 0:
        raise ValueError("GroupNorm(C // 8) requires channel counts divisible by 8")
    if N % NB != 0:
        raise ValueError("batch must be divisible by samples_per_step")
    L = NB * HW
    if (N // NB) > 1 and L % 128 != 0:
        raise ValueError("packed lane width (NB*H*W) must be a multiple of 128")

    # (N, Cin, H, W) -> (Cin, N*HW): channels on sublanes, batch*spatial packed on lanes.
    x = jnp.transpose(x_nchw.reshape(N, Cin, HW), (1, 0, 2)).reshape(Cin, N * HW)
    x = x.astype(jnp.float32)

    col = lambda a: a.reshape(-1, 1).astype(jnp.float32)

    # conv1 + skip conv fused weights: (Cmid + Cout, Cin)
    w_cat = jnp.concatenate([params['w1'].T, params['ws'].T], axis=0).astype(jnp.float32)
    # 3x3 conv as one im2col weight (Cmid, 9*Cmid); blocks ordered (ky, kx) as in kernel.
    w2 = params['w2']
    w2_mat = jnp.concatenate([w2[ky, kx].T for ky in range(3) for kx in range(3)],
                             axis=1).astype(jnp.float32)
    w3_t = params['w3'].T.astype(jnp.float32)

    # Consolidated per-channel column vectors (order must match the kernel's `take`s).
    vecs = jnp.concatenate(
        [col(params['b1']), col(params['bs']),
         col(params['g1']), col(params['be1']),
         col(params['b2']), col(params['g2']), col(params['be2']),
         col(params['b3']), col(params['g3']), col(params['be3'])], axis=0)

    p_mid = _group_projector(Cmid, Cmid // 8)
    p_out = _group_projector(Cout, Cout // 8)

    # 3x3 boundary masks, batch/step-invariant, built once: (9, L) f32.
    lane = jnp.arange(L, dtype=jnp.int32) % HW
    hh = lane // W
    ww = lane % W
    rows = []
    for ky in range(3):
        for kx in range(3):
            dy, dx = ky - 1, kx - 1
            rows.append((hh + dy >= 0) & (hh + dy < H) & (ww + dx >= 0) & (ww + dx < W))
    mask = jnp.stack(rows, axis=0).astype(jnp.float32)

    param_arrays = [w_cat, w2_mat, w3_t, vecs, p_mid, p_out, mask]

    kernel = functools.partial(_bottleneck_kernel, H=H, W=W, NB=NB, Cmid=Cmid, Cout=Cout)
    out = pl.pallas_call(
        kernel,
        out_shape=jax.ShapeDtypeStruct((Cout, N * HW), jnp.float32),
        grid_spec=pltpu.PrefetchScalarGridSpec(
            num_scalar_prefetch=0,
            grid=(N // NB,),
            in_specs=[pl.BlockSpec((Cin, L), lambda n: (0, n))]
                     + [_const_spec(a) for a in param_arrays],
            out_specs=pl.BlockSpec((Cout, L), lambda n: (0, n)),
            scratch_shapes=[pltpu.VMEM((9 * Cmid, L), jnp.float32)],
        ),
        compiler_params=pltpu.CompilerParams(dimension_semantics=("parallel",)),
    )(x, *param_arrays)

    return jnp.transpose(out.reshape(Cout, N, HW), (1, 0, 2)).reshape(N, Cout, H, W)


def _reference(x_nchw, params):
    """Plain-JAX reference implementation (mirrors the PyTorch forward)."""
    x = jnp.transpose(x_nchw, (0, 2, 3, 1))

    def conv1x1(z, w, b):
        return jnp.einsum('nhwc,cd->nhwd', z, w) + b.reshape(1, 1, 1, -1)

    def conv3x3(z, w, b):
        out = lax.conv_general_dilated(z, w, (1, 1), ((1, 1), (1, 1)),
                                       dimension_numbers=('NHWC', 'HWIO', 'NHWC'))
        return out + b.reshape(1, 1, 1, -1)

    def gn(z, gamma, beta, groups, eps=EPS):
        N, H, W, C = z.shape
        zg = z.reshape(N, H, W, groups, C // groups)
        mean = zg.mean(axis=(1, 2, 4), keepdims=True)
        var = ((zg - mean) ** 2).mean(axis=(1, 2, 4), keepdims=True)
        zn = ((zg - mean) * lax.rsqrt(var + eps)).reshape(N, H, W, C)
        return zn * gamma.reshape(1, 1, 1, C) + beta.reshape(1, 1, 1, C)

    Cmid = params['w1'].shape[1]
    Cout = params['w3'].shape[1]
    y = jax.nn.relu(gn(conv1x1(x, params['w1'], params['b1']),
                       params['g1'][0], params['be1'][0], Cmid // 8))
    y = jax.nn.relu(gn(conv3x3(y, params['w2'], params['b2']),
                       params['g2'][0], params['be2'][0], Cmid // 8))
    y = gn(conv1x1(y, params['w3'], params['b3']),
           params['g3'][0], params['be3'][0], Cout // 8)
    res = conv1x1(x, params['ws'], params['bs'])
    out = jax.nn.relu(y + res)
    return jnp.transpose(out, (0, 3, 1, 2))


def init_params(key, cin, cout):
    """Deterministic synthetic parameters (shapes follow ConvBottleNeck.__init__)."""
    cmid = cout // 2
    ks = jax.random.split(key, 14)
    f32 = jnp.float32
    return {
        'w1': 0.1 * jax.random.normal(ks[0], (cin, cmid), f32),
        'b1': 0.05 * jax.random.normal(ks[1], (1, cmid), f32),
        'g1': 1.0 + 0.1 * jax.random.normal(ks[2], (1, cmid), f32),
        'be1': 0.05 * jax.random.normal(ks[3], (1, cmid), f32),
        'w2': 0.1 * jax.random.normal(ks[4], (3, 3, cmid, cmid), f32),
        'b2': 0.05 * jax.random.normal(ks[5], (1, cmid), f32),
        'g2': 1.0 + 0.1 * jax.random.normal(ks[6], (1, cmid), f32),
        'be2': 0.05 * jax.random.normal(ks[7], (1, cmid), f32),
        'w3': 0.1 * jax.random.normal(ks[8], (cmid, cout), f32),
        'b3': 0.05 * jax.random.normal(ks[9], (1, cout), f32),
        'g3': 1.0 + 0.1 * jax.random.normal(ks[10], (1, cout), f32),
        'be3': 0.05 * jax.random.normal(ks[11], (1, cout), f32),
        'ws': 0.1 * jax.random.normal(ks[12], (cin, cout), f32),
        'bs': 0.05 * jax.random.normal(ks[13], (1, cout), f32),
    }


if __name__ == "__main__":
    key = jax.random.PRNGKey(0)
    k_x, k_p, k_x2 = jax.random.split(key, 3)

    # in_channels=8, out_channels=32 (mid=16, GroupNorm group counts >= 1)
    N, Cin, H, W = 2, 8, 16, 16
    Cout = 32

    x = jax.random.normal(k_x, (N, Cin, H, W), jnp.float32)
    params = init_params(k_p, Cin, Cout)

    # Config 1: one sample per grid step (grid of 2 "parallel" steps — v7x friendly).
    out = jax.block_until_ready(conv_bottleneck_forward(x, params, samples_per_step=1))
    assert out.shape == (N, Cout, H, W)
    ref = _reference(x, params)
    err = float(jnp.max(jnp.abs(out - ref)))
    if not (err < 1e-3):
        raise AssertionError(f"Pallas kernel (NB=1) mismatch vs reference: {err}")

    # Config 2: lane-axis batch packing (2 samples per grid step, per-sample GroupNorm).
    x2 = jax.random.normal(k_x2, (4, Cin, H, W), jnp.float32)
    out2 = jax.block_until_ready(conv_bottleneck_forward(x2, params, samples_per_step=2))
    ref2 = _reference(x2, params)
    err2 = float(jnp.max(jnp.abs(out2 - ref2)))
    if not (err2 < 1e-3):
        raise AssertionError(f"Pallas kernel (NB=2) mismatch vs reference: {err2}")

    print("KERNEL_OK")
</pallas_src>

<mosaic_0001>
module attributes {stable_mosaic.version = 11 : i64} {
  func.func @_bottleneck_kernel(%arg0: i32, %arg1: memref<8x256xf32, #tpu.memory_space<vmem>>, %arg2: memref<48x8xf32, #tpu.memory_space<vmem>>, %arg3: memref<16x144xf32, #tpu.memory_space<vmem>>, %arg4: memref<32x16xf32, #tpu.memory_space<vmem>>, %arg5: memref<224x1xf32, #tpu.memory_space<vmem>>, %arg6: memref<16x16xf32, #tpu.memory_space<vmem>>, %arg7: memref<32x32xf32, #tpu.memory_space<vmem>>, %arg8: memref<9x256xf32, #tpu.memory_space<vmem>>, %arg9: memref<32x256xf32, #tpu.memory_space<vmem>>, %arg10: memref<144x256xf32, #tpu.memory_space<vmem>>) attributes {dimension_semantics = [#tpu.dimension_semantics<parallel>], iteration_bounds = array<i64: 2>, scalar_prefetch = 0 : i64, scratch_operands = 1 : i64, tpu.core_type = #tpu.core_type<tc>, window_params = [{transform_indices = @transform_0, window_bounds = array<i64: 8, 256>}, {pipeline_mode = #tpu.pipeline_mode<synchronous>, transform_indices = @transform_1, window_bounds = array<i64: 48, 8>}, {pipeline_mode = #tpu.pipeline_mode<synchronous>, transform_indices = @transform_2, window_bounds = array<i64: 16, 144>}, {pipeline_mode = #tpu.pipeline_mode<synchronous>, transform_indices = @transform_3, window_bounds = array<i64: 32, 16>}, {pipeline_mode = #tpu.pipeline_mode<synchronous>, transform_indices = @transform_4, window_bounds = array<i64: 224, 1>}, {pipeline_mode = #tpu.pipeline_mode<synchronous>, transform_indices = @transform_5, window_bounds = array<i64: 16, 16>}, {pipeline_mode = #tpu.pipeline_mode<synchronous>, transform_indices = @transform_6, window_bounds = array<i64: 32, 32>}, {pipeline_mode = #tpu.pipeline_mode<synchronous>, transform_indices = @transform_7, window_bounds = array<i64: 9, 256>}, {transform_indices = @transform_8, window_bounds = array<i64: 32, 256>}]} {
    %c0 = arith.constant 0 : index
    %c0_0 = arith.constant 0 : index
    %0 = vector.load %arg5[%c0, %c0_0] : memref<224x1xf32, #tpu.memory_space<vmem>>, vector<48x1xf32>
    %c48 = arith.constant 48 : index
    %c0_1 = arith.constant 0 : index
    %1 = vector.load %arg5[%c48, %c0_1] : memref<224x1xf32, #tpu.memory_space<vmem>>, vector<16x1xf32>
    %c64 = arith.constant 64 : index
    %c0_2 = arith.constant 0 : index
    %2 = vector.load %arg5[%c64, %c0_2] : memref<224x1xf32, #tpu.memory_space<vmem>>, vector<16x1xf32>
    %c80 = arith.constant 80 : index
    %c0_3 = arith.constant 0 : index
    %3 = vector.load %arg5[%c80, %c0_3] : memref<224x1xf32, #tpu.memory_space<vmem>>, vector<16x1xf32>
    %c96 = arith.constant 96 : index
    %c0_4 = arith.constant 0 : index
    %4 = vector.load %arg5[%c96, %c0_4] : memref<224x1xf32, #tpu.memory_space<vmem>>, vector<16x1xf32>
    %c112 = arith.constant 112 : index
    %c0_5 = arith.constant 0 : index
    %5 = vector.load %arg5[%c112, %c0_5] : memref<224x1xf32, #tpu.memory_space<vmem>>, vector<16x1xf32>
    %c128 = arith.constant 128 : index
    %c0_6 = arith.constant 0 : index
    %6 = vector.load %arg5[%c128, %c0_6] : memref<224x1xf32, #tpu.memory_space<vmem>>, vector<32x1xf32>
    %c160 = arith.constant 160 : index
    %c0_7 = arith.constant 0 : index
    %7 = vector.load %arg5[%c160, %c0_7] : memref<224x1xf32, #tpu.memory_space<vmem>>, vector<32x1xf32>
    %c192 = arith.constant 192 : index
    %c0_8 = arith.constant 0 : index
    %8 = vector.load %arg5[%c192, %c0_8] : memref<224x1xf32, #tpu.memory_space<vmem>>, vector<32x1xf32>
    %c0_9 = arith.constant 0 : index
    %c0_10 = arith.constant 0 : index
    %9 = vector.load %arg1[%c0_9, %c0_10] : memref<8x256xf32, #tpu.memory_space<vmem>>, vector<8x256xf32>
    %c0_11 = arith.constant 0 : index
    %c0_12 = arith.constant 0 : index
    %10 = vector.load %arg2[%c0_11, %c0_12] : memref<48x8xf32, #tpu.memory_space<vmem>>, vector<48x8xf32>
    %cst = arith.constant dense<0.000000e+00> : vector<48x256xf32>
    %11 = tpu.matmul %10, %9, %cst {dimension_numbers = #tpu.dot_dimension_numbers<[1], [0], [0], [1], [0, 0, 1, 1], [], []>} : vector<48x8xf32>, vector<8x256xf32>, vector<48x256xf32> -> vector<48x256xf32>
    %12 = vector.broadcast %0 : vector<48x1xf32> to vector<48x256xf32>
    %13 = arith.addf %11, %12 : vector<48x256xf32>
    %14 = vector.extract_strided_slice %13 {offsets = [0, 0], sizes = [16, 256], strides = [1, 1]} : vector<48x256xf32> to vector<16x256xf32>
    %15 = vector.extract_strided_slice %13 {offsets = [16, 0], sizes = [32, 256], strides = [1, 1]} : vector<48x256xf32> to vector<32x256xf32>
    %c0_13 = arith.constant 0 : index
    %c0_14 = arith.constant 0 : index
    %16 = vector.load %arg9[%c0_13, %c0_14] : memref<32x256xf32, #tpu.memory_space<vmem>>, vector<32x256xf32>
    tpu.vector_store %arg9[%c0_13, %c0_14], %15 {strides = array<i32>} : memref<32x256xf32, #tpu.memory_space<vmem>>, vector<32x256xf32>,
    %c0_15 = arith.constant 0 : index
    %c0_16 = arith.constant 0 : index
    %17 = vector.load %arg6[%c0_15, %c0_16] : memref<16x16xf32, #tpu.memory_space<vmem>>, vector<16x16xf32>
    %cst_17 = arith.constant dense<0.000000e+00> : vector<16xf32>
    %18 = vector.multi_reduction <add>, %14, %cst_17 [1] : vector<16x256xf32> to vector<16xf32>
    %19 = vector.shape_cast %18 : vector<16xf32> to vector<16x1xf32>
    %cst_18 = arith.constant dense<0.000000e+00> : vector<16x1xf32>
    %20 = tpu.matmul %17, %19, %cst_18 {dimension_numbers = #tpu.dot_dimension_numbers<[1], [0], [0], [1], [0, 0, 1, 1], [], []>} : vector<16x16xf32>, vector<16x1xf32>, vector<16x1xf32> -> vector<16x1xf32>
    %cst_19 = arith.constant 4.8828125E-4 : f32
    %21 = vector.broadcast %cst_19 : f32 to vector<16x1xf32>
    %22 = arith.mulf %20, %21 : vector<16x1xf32>
    %23 = vector.broadcast %22 : vector<16x1xf32> to vector<16x256xf32>
    %24 = arith.subf %14, %23 : vector<16x256xf32>
    %25 = arith.mulf %24, %24 : vector<16x256xf32>
    %cst_20 = arith.constant dense<0.000000e+00> : vector<16xf32>
    %26 = vector.multi_reduction <add>, %25, %cst_20 [1] : vector<16x256xf32> to vector<16xf32>
    %27 = vector.shape_cast %26 : vector<16xf32> to vector<16x1xf32>
    %cst_21 = arith.constant dense<0.000000e+00> : vector<16x1xf32>
    %28 = tpu.matmul %17, %27, %cst_21 {dimension_numbers = #tpu.dot_dimension_numbers<[1], [0], [0], [1], [0, 0, 1, 1], [], []>} : vector<16x16xf32>, vector<16x1xf32>, vector<16x1xf32> -> vector<16x1xf32>
    %cst_22 = arith.constant 4.8828125E-4 : f32
    %29 = vector.broadcast %cst_22 : f32 to vector<16x1xf32>
    %30 = arith.mulf %28, %29 : vector<16x1xf32>
    %cst_23 = arith.constant 9.99999974E-6 : f32
    %31 = vector.broadcast %cst_23 : f32 to vector<16x1xf32>
    %32 = arith.addf %30, %31 : vector<16x1xf32>
    %33 = math.rsqrt %32 : vector<16x1xf32>
    %34 = vector.broadcast %33 : vector<16x1xf32> to vector<16x256xf32>
    %35 = arith.mulf %24, %34 : vector<16x256xf32>
    %36 = vector.broadcast %1 : vector<16x1xf32> to vector<16x256xf32>
    %37 = arith.mulf %35, %36 : vector<16x256xf32>
    %38 = vector.broadcast %2 : vector<16x1xf32> to vector<16x256xf32>
    %39 = arith.addf %37, %38 : vector<16x256xf32>
    %cst_24 = arith.constant 0.000000e+00 : f32
    %40 = vector.broadcast %cst_24 : f32 to vector<16x256xf32>
    %41 = arith.maximumf %39, %40 : vector<16x256xf32>
    %c17_i32 = arith.constant 17 : i32
    %42 = tpu.dynamic_rotate %41 by %c17_i32 dim 1 : vector<16x256xf32>, i32 -> vector<16x256xf32>
    %c0_25 = arith.constant 0 : index
    %c0_26 = arith.constant 0 : index
    %43 = vector.load %arg8[%c0_25, %c0_26] : memref<9x256xf32, #tpu.memory_space<vmem>>, vector<1x256xf32>
    %44 = vector.broadcast %43 : vector<1x256xf32> to vector<16x256xf32>
    %45 = arith.mulf %42, %44 : vector<16x256xf32>
    %c0_27 = arith.constant 0 : index
    %c0_28 = arith.constant 0 : index
    %46 = vector.load %arg10[%c0_27, %c0_28] : memref<144x256xf32, #tpu.memory_space<vmem>>, vector<16x256xf32>
    tpu.vector_store %arg10[%c0_27, %c0_28], %45 {strides = array<i32>} : memref<144x256xf32, #tpu.memory_space<vmem>>, vector<16x256xf32>,
    %c16_i32 = arith.constant 16 : i32
    %47 = tpu.dynamic_rotate %41 by %c16_i32 dim 1 : vector<16x256xf32>, i32 -> vector<16x256xf32>
    %c1 = arith.constant 1 : index
    %c0_29 = arith.constant 0 : index
    %48 = vector.load %arg8[%c1, %c0_29] : memref<9x256xf32, #tpu.memory_space<vmem>>, vector<1x256xf32>
    %49 = vector.broadcast %48 : vector<1x256xf32> to vector<16x256xf32>
    %50 = arith.mulf %47, %49 : vector<16x256xf32>
    %c16 = arith.constant 16 : index
    %c0_30 = arith.constant 0 : index
    %51 = vector.load %arg10[%c16, %c0_30] : memref<144x256xf32, #tpu.memory_space<vmem>>, vector<16x256xf32>
    tpu.vector_store %arg10[%c16, %c0_30], %50 {strides = array<i32>} : memref<144x256xf32, #tpu.memory_space<vmem>>, vector<16x256xf32>,
    %c15_i32 = arith.constant 15 : i32
    %52 = tpu.dynamic_rotate %41 by %c15_i32 dim 1 : vector<16x256xf32>, i32 -> vector<16x256xf32>
    %c2 = arith.constant 2 : index
    %c0_31 = arith.constant 0 : index
    %53 = vector.load %arg8[%c2, %c0_31] : memref<9x256xf32, #tpu.memory_space<vmem>>, vector<1x256xf32>
    %54 = vector.broadcast %53 : vector<1x256xf32> to vector<16x256xf32>
    %55 = arith.mulf %52, %54 : vector<16x256xf32>
    %c32 = arith.constant 32 : index
    %c0_32 = arith.constant 0 : index
    %56 = vector.load %arg10[%c32, %c0_32] : memref<144x256xf32, #tpu.memory_space<vmem>>, vector<16x256xf32>
    tpu.vector_store %arg10[%c32, %c0_32], %55 {strides = array<i32>} : memref<144x256xf32, #tpu.memory_space<vmem>>, vector<16x256xf32>,
    %c1_i32 = arith.constant 1 : i32
    %57 = tpu.dynamic_rotate %41 by %c1_i32 dim 1 : vector<16x256xf32>, i32 -> vector<16x256xf32>
    %c3 = arith.constant 3 : index
    %c0_33 = arith.constant 0 : index
    %58 = vector.load %arg8[%c3, %c0_33] : memref<9x256xf32, #tpu.memory_space<vmem>>, vector<1x256xf32>
    %59 = vector.broadcast %58 : vector<1x256xf32> to vector<16x256xf32>
    %60 = arith.mulf %57, %59 : vector<16x256xf32>
    %c48_34 = arith.constant 48 : index
    %c0_35 = arith.constant 0 : index
    %61 = vector.load %arg10[%c48_34, %c0_35] : memref<144x256xf32, #tpu.memory_space<vmem>>, vector<16x256xf32>
    tpu.vector_store %arg10[%c48_34, %c0_35], %60 {strides = array<i32>} : memref<144x256xf32, #tpu.memory_space<vmem>>, vector<16x256xf32>,
    %c64_36 = arith.constant 64 : index
    %c0_37 = arith.constant 0 : index
    %62 = vector.load %arg10[%c64_36, %c0_37] : memref<144x256xf32, #tpu.memory_space<vmem>>, vector<16x256xf32>
    tpu.vector_store %arg10[%c64_36, %c0_37], %41 {strides = array<i32>} : memref<144x256xf32, #tpu.memory_space<vmem>>, vector<16x256xf32>,
    %c255_i32 = arith.constant 255 : i32
    %63 = tpu.dynamic_rotate %41 by %c255_i32 dim 1 : vector<16x256xf32>, i32 -> vector<16x256xf32>
    %c5 = arith.constant 5 : index
    %c0_38 = arith.constant 0 : index
    %64 = vector.load %arg8[%c5, %c0_38] : memref<9x256xf32, #tpu.memory_space<vmem>>, vector<1x256xf32>
    %65 = vector.broadcast %64 : vector<1x256xf32> to vector<16x256xf32>
    %66 = arith.mulf %63, %65 : vector<16x256xf32>
    %c80_39 = arith.constant 80 : index
    %c0_40 = arith.constant 0 : index
    %67 = vector.load %arg10[%c80_39, %c0_40] : memref<144x256xf32, #tpu.memory_space<vmem>>, vector<16x256xf32>
    tpu.vector_store %arg10[%c80_39, %c0_40], %66 {strides = array<i32>} : memref<144x256xf32, #tpu.memory_space<vmem>>, vector<16x256xf32>,
    %c241_i32 = arith.constant 241 : i32
    %68 = tpu.dynamic_rotate %41 by %c241_i32 dim 1 : vector<16x256xf32>, i32 -> vector<16x256xf32>
    %c6 = arith.constant 6 : index
    %c0_41 = arith.constant 0 : index
    %69 = vector.load %arg8[%c6, %c0_41] : memref<9x256xf32, #tpu.memory_space<vmem>>, vector<1x256xf32>
    %70 = vector.broadcast %69 : vector<1x256xf32> to vector<16x256xf32>
    %71 = arith.mulf %68, %70 : vector<16x256xf32>
    %c96_42 = arith.constant 96 : index
    %c0_43 = arith.constant 0 : index
    %72 = vector.load %arg10[%c96_42, %c0_43] : memref<144x256xf32, #tpu.memory_space<vmem>>, vector<16x256xf32>
    tpu.vector_store %arg10[%c96_42, %c0_43], %71 {strides = array<i32>} : memref<144x256xf32, #tpu.memory_space<vmem>>, vector<16x256xf32>,
    %c240_i32 = arith.constant 240 : i32
    %73 = tpu.dynamic_rotate %41 by %c240_i32 dim 1 : vector<16x256xf32>, i32 -> vector<16x256xf32>
    %c7 = arith.constant 7 : index
    %c0_44 = arith.constant 0 : index
    %74 = vector.load %arg8[%c7, %c0_44] : memref<9x256xf32, #tpu.memory_space<vmem>>, vector<1x256xf32>
    %75 = vector.broadcast %74 : vector<1x256xf32> to vector<16x256xf32>
    %76 = arith.mulf %73, %75 : vector<16x256xf32>
    %c112_45 = arith.constant 112 : index
    %c0_46 = arith.constant 0 : index
    %77 = vector.load %arg10[%c112_45, %c0_46] : memref<144x256xf32, #tpu.memory_space<vmem>>, vector<16x256xf32>
    tpu.vector_store %arg10[%c112_45, %c0_46], %76 {strides = array<i32>} : memref<144x256xf32, #tpu.memory_space<vmem>>, vector<16x256xf32>,
    %c239_i32 = arith.constant 239 : i32
    %78 = tpu.dynamic_rotate %41 by %c239_i32 dim 1 : vector<16x256xf32>, i32 -> vector<16x256xf32>
    %c8 = arith.constant 8 : index
    %c0_47 = arith.constant 0 : index
    %79 = vector.load %arg8[%c8, %c0_47] : memref<9x256xf32, #tpu.memory_space<vmem>>, vector<1x256xf32>
    %80 = vector.broadcast %79 : vector<1x256xf32> to vector<16x256xf32>
    %81 = arith.mulf %78, %80 : vector<16x256xf32>
    %c128_48 = arith.constant 128 : index
    %c0_49 = arith.constant 0 : index
    %82 = vector.load %arg10[%c128_48, %c0_49] : memref<144x256xf32, #tpu.memory_space<vmem>>, vector<16x256xf32>
    tpu.vector_store %arg10[%c128_48, %c0_49], %81 {strides = array<i32>} : memref<144x256xf32, #tpu.memory_space<vmem>>, vector<16x256xf32>,
    %c0_50 = arith.constant 0 : index
    %c0_51 = arith.constant 0 : index
    %83 = vector.load %arg3[%c0_50, %c0_51] : memref<16x144xf32, #tpu.memory_space<vmem>>, vector<16x144xf32>
    %c0_52 = arith.constant 0 : index
    %c0_53 = arith.constant 0 : index
    %84 = vector.load %arg10[%c0_52, %c0_53] : memref<144x256xf32, #tpu.memory_space<vmem>>, vector<144x256xf32>
    %cst_54 = arith.constant dense<0.000000e+00> : vector<16x256xf32>
    %85 = tpu.matmul %83, %84, %cst_54 {dimension_numbers = #tpu.dot_dimension_numbers<[1], [0], [0], [1], [0, 0, 1, 1], [], []>} : vector<16x144xf32>, vector<144x256xf32>, vector<16x256xf32> -> vector<16x256xf32>
    %86 = vector.broadcast %3 : vector<16x1xf32> to vector<16x256xf32>
    %87 = arith.addf %85, %86 : vector<16x256xf32>
    %c0_55 = arith.constant 0 : index
    %c0_56 = arith.constant 0 : index
    %88 = vector.load %arg6[%c0_55, %c0_56] : memref<16x16xf32, #tpu.memory_space<vmem>>, vector<16x16xf32>
    %cst_57 = arith.constant dense<0.000000e+00> : vector<16xf32>
    %89 = vector.multi_reduction <add>, %87, %cst_57 [1] : vector<16x256xf32> to vector<16xf32>
    %90 = vector.shape_cast %89 : vector<16xf32> to vector<16x1xf32>
    %cst_58 = arith.constant dense<0.000000e+00> : vector<16x1xf32>
    %91 = tpu.matmul %88, %90, %cst_58 {dimension_numbers = #tpu.dot_dimension_numbers<[1], [0], [0], [1], [0, 0, 1, 1], [], []>} : vector<16x16xf32>, vector<16x1xf32>, vector<16x1xf32> -> vector<16x1xf32>
    %cst_59 = arith.constant 4.8828125E-4 : f32
    %92 = vector.broadcast %cst_59 : f32 to vector<16x1xf32>
    %93 = arith.mulf %91, %92 : vector<16x1xf32>
    %94 = vector.broadcast %93 : vector<16x1xf32> to vector<16x256xf32>
    %95 = arith.subf %87, %94 : vector<16x256xf32>
    %96 = arith.mulf %95, %95 : vector<16x256xf32>
    %cst_60 = arith.constant dense<0.000000e+00> : vector<16xf32>
    %97 = vector.multi_reduction <add>, %96, %cst_60 [1] : vector<16x256xf32> to vector<16xf32>
    %98 = vector.shape_cast %97 : vector<16xf32> to vector<16x1xf32>
    %cst_61 = arith.constant dense<0.000000e+00> : vector<16x1xf32>
    %99 = tpu.matmul %88, %98, %cst_61 {dimension_numbers = #tpu.dot_dimension_numbers<[1], [0], [0], [1], [0, 0, 1, 1], [], []>} : vector<16x16xf32>, vector<16x1xf32>, vector<16x1xf32> -> vector<16x1xf32>
    %cst_62 = arith.constant 4.8828125E-4 : f32
    %100 = vector.broadcast %cst_62 : f32 to vector<16x1xf32>
    %101 = arith.mulf %99, %100 : vector<16x1xf32>
    %cst_63 = arith.constant 9.99999974E-6 : f32
    %102 = vector.broadcast %cst_63 : f32 to vector<16x1xf32>
    %103 = arith.addf %101, %102 : vector<16x1xf32>
    %104 = math.rsqrt %103 : vector<16x1xf32>
    %105 = vector.broadcast %104 : vector<16x1xf32> to vector<16x256xf32>
    %106 = arith.mulf %95, %105 : vector<16x256xf32>
    %107 = vector.broadcast %4 : vector<16x1xf32> to vector<16x256xf32>
    %108 = arith.mulf %106, %107 : vector<16x256xf32>
    %109 = vector.broadcast %5 : vector<16x1xf32> to vector<16x256xf32>
    %110 = arith.addf %108, %109 : vector<16x256xf32>
    %cst_64 = arith.constant 0.000000e+00 : f32
    %111 = vector.broadcast %cst_64 : f32 to vector<16x256xf32>
    %112 = arith.maximumf %110, %111 : vector<16x256xf32>
    %c0_65 = arith.constant 0 : index
    %c0_66 = arith.constant 0 : index
    %113 = vector.load %arg4[%c0_65, %c0_66] : memref<32x16xf32, #tpu.memory_space<vmem>>, vector<32x16xf32>
    %cst_67 = arith.constant dense<0.000000e+00> : vector<32x256xf32>
    %114 = tpu.matmul %113, %112, %cst_67 {dimension_numbers = #tpu.dot_dimension_numbers<[1], [0], [0], [1], [0, 0, 1, 1], [], []>} : vector<32x16xf32>, vector<16x256xf32>, vector<32x256xf32> -> vector<32x256xf32>
    %115 = vector.broadcast %6 : vector<32x1xf32> to vector<32x256xf32>
    %116 = arith.addf %114, %115 : vector<32x256xf32>
    %c0_68 = arith.constant 0 : index
    %c0_69 = arith.constant 0 : index
    %117 = vector.load %arg7[%c0_68, %c0_69] : memref<32x32xf32, #tpu.memory_space<vmem>>, vector<32x32xf32>
    %cst_70 = arith.constant dense<0.000000e+00> : vector<32xf32>
    %118 = vector.multi_reduction <add>, %116, %cst_70 [1] : vector<32x256xf32> to vector<32xf32>
    %119 = vector.shape_cast %118 : vector<32xf32> to vector<32x1xf32>
    %cst_71 = arith.constant dense<0.000000e+00> : vector<32x1xf32>
    %120 = tpu.matmul %117, %119, %cst_71 {dimension_numbers = #tpu.dot_dimension_numbers<[1], [0], [0], [1], [0, 0, 1, 1], [], []>} : vector<32x32xf32>, vector<32x1xf32>, vector<32x1xf32> -> vector<32x1xf32>
    %cst_72 = arith.constant 4.8828125E-4 : f32
    %121 = vector.broadcast %cst_72 : f32 to vector<32x1xf32>
    %122 = arith.mulf %120, %121 : vector<32x1xf32>
    %123 = vector.broadcast %122 : vector<32x1xf32> to vector<32x256xf32>
    %124 = arith.subf %116, %123 : vector<32x256xf32>
    %125 = arith.mulf %124, %124 : vector<32x256xf32>
    %cst_73 = arith.constant dense<0.000000e+00> : vector<32xf32>
    %126 = vector.multi_reduction <add>, %125, %cst_73 [1] : vector<32x256xf32> to vector<32xf32>
    %127 = vector.shape_cast %126 : vector<32xf32> to vector<32x1xf32>
    %cst_74 = arith.constant dense<0.000000e+00> : vector<32x1xf32>
    %128 = tpu.matmul %117, %127, %cst_74 {dimension_numbers = #tpu.dot_dimension_numbers<[1], [0], [0], [1], [0, 0, 1, 1], [], []>} : vector<32x32xf32>, vector<32x1xf32>, vector<32x1xf32> -> vector<32x1xf32>
    %cst_75 = arith.constant 4.8828125E-4 : f32
    %129 = vector.broadcast %cst_75 : f32 to vector<32x1xf32>
    %130 = arith.mulf %128, %129 : vector<32x1xf32>
    %cst_76 = arith.constant 9.99999974E-6 : f32
    %131 = vector.broadcast %cst_76 : f32 to vector<32x1xf32>
    %132 = arith.addf %130, %131 : vector<32x1xf32>
    %133 = math.rsqrt %132 : vector<32x1xf32>
    %134 = vector.broadcast %133 : vector<32x1xf32> to vector<32x256xf32>
    %135 = arith.mulf %124, %134 : vector<32x256xf32>
    %136 = vector.broadcast %7 : vector<32x1xf32> to vector<32x256xf32>
    %137 = arith.mulf %135, %136 : vector<32x256xf32>
    %138 = vector.broadcast %8 : vector<32x1xf32> to vector<32x256xf32>
    %139 = arith.addf %137, %138 : vector<32x256xf32>
    %c0_77 = arith.constant 0 : index
    %c0_78 = arith.constant 0 : index
    %140 = vector.load %arg9[%c0_77, %c0_78] : memref<32x256xf32, #tpu.memory_space<vmem>>, vector<32x256xf32>
    %141 = arith.addf %139, %140 : vector<32x256xf32>
    %cst_79 = arith.constant 0.000000e+00 : f32
    %142 = vector.broadcast %cst_79 : f32 to vector<32x256xf32>
    %143 = arith.maximumf %141, %142 : vector<32x256xf32>
    %c0_80 = arith.constant 0 : index
    %c0_81 = arith.constant 0 : index
    %144 = vector.load %arg9[%c0_80, %c0_81] : memref<32x256xf32, #tpu.memory_space<vmem>>, vector<32x256xf32>
    tpu.vector_store %arg9[%c0_80, %c0_81], %143 {strides = array<i32>} : memref<32x256xf32, #tpu.memory_space<vmem>>, vector<32x256xf32>,
    return
  }
  func.func @transform_0(%arg0: i32) -> (i32, i32) {
    %c0_i32 = arith.constant 0 : i32
    %c0_i32_0 = arith.constant 0 : i32
    return %c0_i32, %arg0 : i32, i32
  }
  func.func @transform_1(%arg0: i32) -> (i32, i32) {
    %c0_i32 = arith.constant 0 : i32
    %c0_i32_0 = arith.constant 0 : i32
    %c0_i32_1 = arith.constant 0 : i32
    return %c0_i32, %c0_i32_0 : i32, i32
  }
  func.func @transform_2(%arg0: i32) -> (i32, i32) {
    %c0_i32 = arith.constant 0 : i32
    %c0_i32_0 = arith.constant 0 : i32
    %c0_i32_1 = arith.constant 0 : i32
    return %c0_i32, %c0_i32_0 : i32, i32
  }
  func.func @transform_3(%arg0: i32) -> (i32, i32) {
    %c0_i32 = arith.constant 0 : i32
    %c0_i32_0 = arith.constant 0 : i32
    %c0_i32_1 = arith.constant 0 : i32
    return %c0_i32, %c0_i32_0 : i32, i32
  }
  func.func @transform_4(%arg0: i32) -> (i32, i32) {
    %c0_i32 = arith.constant 0 : i32
    %c0_i32_0 = arith.constant 0 : i32
    %c0_i32_1 = arith.constant 0 : i32
    return %c0_i32, %c0_i32_0 : i32, i32
  }
  func.func @transform_5(%arg0: i32) -> (i32, i32) {
    %c0_i32 = arith.constant 0 : i32
    %c0_i32_0 = arith.constant 0 : i32
    %c0_i32_1 = arith.constant 0 : i32
    return %c0_i32, %c0_i32_0 : i32, i32
  }
  func.func @transform_6(%arg0: i32) -> (i32, i32) {
    %c0_i32 = arith.constant 0 : i32
    %c0_i32_0 = arith.constant 0 : i32
    %c0_i32_1 = arith.constant 0 : i32
    return %c0_i32, %c0_i32_0 : i32, i32
  }
  func.func @transform_7(%arg0: i32) -> (i32, i32) {
    %c0_i32 = arith.constant 0 : i32
    %c0_i32_0 = arith.constant 0 : i32
    %c0_i32_1 = arith.constant 0 : i32
    return %c0_i32, %c0_i32_0 : i32, i32
  }
  func.func @transform_8(%arg0: i32) -> (i32, i32) {
    %c0_i32 = arith.constant 0 : i32
    %c0_i32_0 = arith.constant 0 : i32
    return %c0_i32, %arg0 : i32, i32
  }
}

</mosaic_0001>

<llo_original>
// kernel: tpu_custom_call.1
$region0: #{tpu_custom_call.1}
  #allocation0 [shape = 'u32[]', space=smem, size = 0x4, offset = 0x4, fixed_abs, tag = 'smem constant byte address 0x4 - core index']
  #allocation1 [shape = 'u32[144,128]{1,0:T(1,128)}', space=vmem, size = 0x12000, scoped, tag = 'internal scratch']
  #allocation2 [shape = 'f32[144,256]{1,0:T(8,128)}', space=vmem, size = 0x24000, scoped, tag = 'scratch operand']
  %s0 = inlined_call_operand.vmem [shape: f32[8,512], index: 0, kind: input, shape index: {}]
  %s1 = inlined_call_operand.vmem [shape: f32[48,8], index: 1, kind: input, shape index: {}]
  %s2 = inlined_call_operand.vmem [shape: f32[16,144], index: 2, kind: input, shape index: {}]
  %s3 = inlined_call_operand.vmem [shape: f32[32,16], index: 3, kind: input, shape index: {}]
  %s4 = inlined_call_operand.vmem [shape: f32[224,1], index: 4, kind: input, shape index: {}]
  %s5 = inlined_call_operand.vmem [shape: f32[16,16], index: 5, kind: input, shape index: {}]
  %s6 = inlined_call_operand.vmem [shape: f32[32,32], index: 6, kind: input, shape index: {}]
  %s7 = inlined_call_operand.vmem [shape: f32[9,256], index: 7, kind: input, shape index: {}]
  %s8 = inlined_call_operand.hbm [shape: f32[32,512], index: 8, kind: output, shape index: {}]
  %s9 = sld [smem:[#allocation0]]
  $region65: #{tpu_custom_call.1} parent=0
    _
  %s11 = ssub.s32 1, %s9
  %s12 = scalar_select 0, %s11, %s9
  $region1: #{tpu_custom_call.1} parent=0
    #allocation3 [shape = 'u8[65536]{0}', space=vmem, size = 0x10000, scoped, tag = 'output window, operand 0']
    #allocation4 [shape = 's32[2]{0}', space=sflag, size = 0x8, scoped, tag = 'scoped memory for tpu_custom_call.1']
    %13 = vsyncpa [#allocation4], 0
    %s14 = scalar_lea.sflag [#allocation4], 1
    %15 = vsyncpa %s14, 0
    loop: start=0, step=1, limit=4
    $region2: #{tpu_custom_call.1} parent=1 // loop_pre_header
      _
    $region3: #{tpu_custom_call.1} parent=1 // loop_header
      %s17 = sphi 0, %s21
      %p18 = scmp.ge.s32.totalorder %s17, 4
      %s27 = sphi 0, %s29
      %s30 = sphi 0, %s27
      %s31 = sphi 0, %s30
      %s47 = sphi 0, %s31
      %s51 = sphi 0, %s51
      %s53 = sphi 0, %s51
      %s54 = sphi 0, %s53
      %s68 = sphi 0, %s54
      %s72 = sphi 0, %s72
      %s74 = sphi 0, %s72
      %s75 = sphi 0, %s74
      %s89 = sphi 0, %s75
      %s93 = sphi 0, %s93
      %s95 = sphi 0, %s93
      %s96 = sphi 0, %s95
      %s110 = sphi 0, %s96
      %s114 = sphi 0, %s114
      %s116 = sphi 0, %s114
      %s117 = sphi 0, %s116
      %s131 = sphi 0, %s117
      %s135 = sphi 0, %s135
      %s137 = sphi 0, %s135
      %s138 = sphi 0, %s137
      %s152 = sphi 0, %s138
      %s156 = sphi 0, %s156
      %s158 = sphi 0, %s156
      %s159 = sphi 0, %s158
      %s173 = sphi 0, %s159
      %s177 = sphi 0, %s177
      %s179 = sphi 0, %s177
      %s180 = sphi 0, %s179
      %s194 = sphi 0, %s180
      %s200 = sphi 0, %s202
      %s203 = sphi 0, %s200
      %s204 = sphi 0, %s203
      %s220 = sphi 0, %s204
    $region4: #{tpu_custom_call.1} parent=1 // loop_header_branch
      %20 = sbr.rel (%p18) target = $region8
    $region5: #{tpu_custom_call.1} parent=1 // loop_body
      %s22 = ssub.s32 %s17, 1
      %s23 = ssub.s32 %s17, 2
      %s24 = sadd.s32 %s17, 1
      %s25 = ssub.s32 %s17, %s24
      %p26 = scmp.eq.s32.totalorder %s25, 0
      %s28 = sadd.s32 %s27, 1
      %s29 = scalar_select %p26, %s27, %s28
      %p32 = pneg %p26
      %p33 = scmp.eq.s32.totalorder %s17, 1
      %p34 = por %p32, %p33
      %p35 = scmp.ne.s32.totalorder %s27, %s30
      %p36 = scmp.eq.s32.totalorder %s17, 0
      %p37 = por %p35, %p36
      %p38 = scmp.ne.s32.totalorder %s27, %s30
      %p39 = scmp.eq.s32.totalorder %s22, 1
      %p40 = por %p38, %p39
      %p41 = scmp.ne.s32.totalorder %s30, %s31
      %p42 = scmp.eq.s32.totalorder %s22, 0
      %p43 = por %p41, %p42
      %p44 = scmp.ne.s32.totalorder %s30, %s31
      %p45 = scmp.eq.s32.totalorder %s23, 1
      %p46 = por %p44, %p45
      %p48 = scmp.ne.s32.totalorder %s31, %s47
      %p49 = scmp.eq.s32.totalorder %s23, 0
      %p50 = por %p48, %p49
      %s52 = sadd.s32 %s51, 1
      %p55 = scmp.eq.s32.totalorder %s17, 1
      %p56 = scmp.ne.s32.totalorder %s51, %s53
      %p57 = scmp.eq.s32.totalorder %s17, 0
      %p58 = por %p56, %p57
      %p59 = scmp.ne.s32.totalorder %s51, %s53
      %p60 = scmp.eq.s32.totalorder %s22, 1
      %p61 = por %p59, %p60
      %p62 = scmp.ne.s32.totalorder %s53, %s54
      %p63 = scmp.eq.s32.totalorder %s22, 0
      %p64 = por %p62, %p63
      %p65 = scmp.ne.s32.totalorder %s53, %s54
      %p66 = scmp.eq.s32.totalorder %s23, 1
      %p67 = por %p65, %p66
      %p69 = scmp.ne.s32.totalorder %s54, %s68
      %p70 = scmp.eq.s32.totalorder %s23, 0
      %p71 = por %p69, %p70
      %s73 = sadd.s32 %s72, 1
      %p76 = scmp.eq.s32.totalorder %s17, 1
      %p77 = scmp.ne.s32.totalorder %s72, %s74
      %p78 = scmp.eq.s32.totalorder %s17, 0
      %p79 = por %p77, %p78
      %p80 = scmp.ne.s32.totalorder %s72, %s74
      %p81 = scmp.eq.s32.totalorder %s22, 1
      %p82 = por %p80, %p81
      %p83 = scmp.ne.s32.totalorder %s74, %s75
      %p84 = scmp.eq.s32.totalorder %s22, 0
      %p85 = por %p83, %p84
      %p86 = scmp.ne.s32.totalorder %s74, %s75
      %p87 = scmp.eq.s32.totalorder %s23, 1
      %p88 = por %p86, %p87
      %p90 = scmp.ne.s32.totalorder %s75, %s89
      %p91 = scmp.eq.s32.totalorder %s23, 0
      %p92 = por %p90, %p91
      %s94 = sadd.s32 %s93, 1
      %p97 = scmp.eq.s32.totalorder %s17, 1
      %p98 = scmp.ne.s32.totalorder %s93, %s95
      %p99 = scmp.eq.s32.totalorder %s17, 0
      %p100 = por %p98, %p99
      %p101 = scmp.ne.s32.totalorder %s93, %s95
      %p102 = scmp.eq.s32.totalorder %s22, 1
      %p103 = por %p101, %p102
      %p104 = scmp.ne.s32.totalorder %s95, %s96
      %p105 = scmp.eq.s32.totalorder %s22, 0
      %p106 = por %p104, %p105
      %p107 = scmp.ne.s32.totalorder %s95, %s96
      %p108 = scmp.eq.s32.totalorder %s23, 1
      %p109 = por %p107, %p108
      %p111 = scmp.ne.s32.totalorder %s96, %s110
      %p112 = scmp.eq.s32.totalorder %s23, 0
      %p113 = por %p111, %p112
      %s115 = sadd.s32 %s114, 1
      %p118 = scmp.eq.s32.totalorder %s17, 1
      %p119 = scmp.ne.s32.totalorder %s114, %s116
      %p120 = scmp.eq.s32.totalorder %s17, 0
      %p121 = por %p119, %p120
      %p122 = scmp.ne.s32.totalorder %s114, %s116
      %p123 = scmp.eq.s32.totalorder %s22, 1
      %p124 = por %p122, %p123
      %p125 = scmp.ne.s32.totalorder %s116, %s117
      %p126 = scmp.eq.s32.totalorder %s22, 0
      %p127 = por %p125, %p126
      %p128 = scmp.ne.s32.totalorder %s116, %s117
      %p129 = scmp.eq.s32.totalorder %s23, 1
      %p130 = por %p128, %p129
      %p132 = scmp.ne.s32.totalorder %s117, %s131
      %p133 = scmp.eq.s32.totalorder %s23, 0
      %p134 = por %p132, %p133
      %s136 = sadd.s32 %s135, 1
      %p139 = scmp.eq.s32.totalorder %s17, 1
      %p140 = scmp.ne.s32.totalorder %s135, %s137
      %p141 = scmp.eq.s32.totalorder %s17, 0
      %p142 = por %p140, %p141
      %p143 = scmp.ne.s32.totalorder %s135, %s137
      %p144 = scmp.eq.s32.totalorder %s22, 1
      %p145 = por %p143, %p144
      %p146 = scmp.ne.s32.totalorder %s137, %s138
      %p147 = scmp.eq.s32.totalorder %s22, 0
      %p148 = por %p146, %p147
      %p149 = scmp.ne.s32.totalorder %s137, %s138
      %p150 = scmp.eq.s32.totalorder %s23, 1
      %p151 = por %p149, %p150
      %p153 = scmp.ne.s32.totalorder %s138, %s152
      %p154 = scmp.eq.s32.totalorder %s23, 0
      %p155 = por %p153, %p154
      %s157 = sadd.s32 %s156, 1
      %p160 = scmp.eq.s32.totalorder %s17, 1
      %p161 = scmp.ne.s32.totalorder %s156, %s158
      %p162 = scmp.eq.s32.totalorder %s17, 0
      %p163 = por %p161, %p162
      %p164 = scmp.ne.s32.totalorder %s156, %s158
      %p165 = scmp.eq.s32.totalorder %s22, 1
      %p166 = por %p164, %p165
      %p167 = scmp.ne.s32.totalorder %s158, %s159
      %p168 = scmp.eq.s32.totalorder %s22, 0
      %p169 = por %p167, %p168
      %p170 = scmp.ne.s32.totalorder %s158, %s159
      %p171 = scmp.eq.s32.totalorder %s23, 1
      %p172 = por %p170, %p171
      %p174 = scmp.ne.s32.totalorder %s159, %s173
      %p175 = scmp.eq.s32.totalorder %s23, 0
      %p176 = por %p174, %p175
      %s178 = sadd.s32 %s177, 1
      %p181 = scmp.eq.s32.totalorder %s17, 1
      %p182 = scmp.ne.s32.totalorder %s177, %s179
      %p183 = scmp.eq.s32.totalorder %s17, 0
      %p184 = por %p182, %p183
      %p185 = scmp.ne.s32.totalorder %s177, %s179
      %p186 = scmp.eq.s32.totalorder %s22, 1
      %p187 = por %p185, %p186
      %p188 = scmp.ne.s32.totalorder %s179, %s180
      %p189 = scmp.eq.s32.totalorder %s22, 0
      %p190 = por %p188, %p189
      %p191 = scmp.ne.s32.totalorder %s179, %s180
      %p192 = scmp.eq.s32.totalorder %s23, 1
      %p193 = por %p191, %p192
      %p195 = scmp.ne.s32.totalorder %s180, %s194
      %p196 = scmp.eq.s32.totalorder %s23, 0
      %p197 = por %p195, %p196
      %s198 = ssub.s32 %s17, %s24
      %p199 = scmp.eq.s32.totalorder %s198, 0
      %s201 = sadd.s32 %s200, 1
      %s202 = scalar_select %p199, %s200, %s201
      %p205 = pneg %p199
      %p206 = scmp.eq.s32.totalorder %s17, 1
      %p207 = por %p205, %p206
      %p208 = scmp.ne.s32.totalorder %s200, %s203
      %p209 = scmp.eq.s32.totalorder %s17, 0
      %p210 = por %p208, %p209
      %p211 = scmp.ne.s32.totalorder %s200, %s203
      %p212 = scmp.eq.s32.totalorder %s22, 1
      %p213 = por %p211, %p212
      %p214 = scmp.ne.s32.totalorder %s203, %s204
      %p215 = scmp.eq.s32.totalorder %s22, 0
      %p216 = por %p214, %p215
      %p217 = scmp.ne.s32.totalorder %s203, %s204
      %p218 = scmp.eq.s32.totalorder %s23, 1
      %p219 = por %p217, %p218
      %p221 = scmp.ne.s32.totalorder %s204, %s220
      %p222 = scmp.eq.s32.totalorder %s23, 0
      %p223 = por %p221, %p222
      %p224 = scmp.le.s32.totalorder 1, %s17
      %p225 = scmp.lt.s32.totalorder %s17, 3
      %p226 = pnand %p224, %p225
      %p227 = pneg %p226
      // Predicated region
      $region9: #{tpu_custom_call.1} parent=5 // pred_check
        _
      $region10: #{tpu_custom_call.1} parent=5 // pred_check_branch
        %229 = sbr.rel (%p226) target = $region12
      $region11: #{tpu_custom_call.1} parent=5 // pred_region
        %s230 = ssub.s32 %s17, 1
        // Predicated region
        $region13: #{tpu_custom_call.1} parent=11 // pred_check
          %p231 = pneg %p64
        $region14: #{tpu_custom_call.1} parent=11 // pred_check_branch
          %233 = sbr.rel (%p231) target = $region16
        $region15: #{tpu_custom_call.1} parent=11 // pred_region
          _
        $region16: #{tpu_custom_call.1} parent=11 // pred_fallthru
          _
        // Predicated region
        $region17: #{tpu_custom_call.1} parent=11 // pred_check
          %p234 = pneg %p85
        $region18: #{tpu_custom_call.1} parent=11 // pred_check_branch
          %236 = sbr.rel (%p234) target = $region20
        $region19: #{tpu_custom_call.1} parent=11 // pred_region
          _
        $region20: #{tpu_custom_call.1} parent=11 // pred_fallthru
          _
        // Predicated region
        $region21: #{tpu_custom_call.1} parent=11 // pred_check
          %p237 = pneg %p106
        $region22: #{tpu_custom_call.1} parent=11 // pred_check_branch
          %239 = sbr.rel (%p237) target = $region24
        $region23: #{tpu_custom_call.1} parent=11 // pred_region
          _
        $region24: #{tpu_custom_call.1} parent=11 // pred_fallthru
          _
        // Predicated region
        $region25: #{tpu_custom_call.1} parent=11 // pred_check
          %p240 = pneg %p127
        $region26: #{tpu_custom_call.1} parent=11 // pred_check_branch
          %242 = sbr.rel (%p240) target = $region28
        $region27: #{tpu_custom_call.1} parent=11 // pred_region
          _
        $region28: #{tpu_custom_call.1} parent=11 // pred_fallthru
          _
        // Predicated region
        $region29: #{tpu_custom_call.1} parent=11 // pred_check
          %p243 = pneg %p148
        $region30: #{tpu_custom_call.1} parent=11 // pred_check_branch
          %245 = sbr.rel (%p243) target = $region32
        $region31: #{tpu_custom_call.1} parent=11 // pred_region
          _
        $region32: #{tpu_custom_call.1} parent=11 // pred_fallthru
          _
        // Predicated region
        $region33: #{tpu_custom_call.1} parent=11 // pred_check
          %p246 = pneg %p169
        $region34: #{tpu_custom_call.1} parent=11 // pred_check_branch
          %248 = sbr.rel (%p246) target = $region36
        $region35: #{tpu_custom_call.1} parent=11 // pred_region
          _
        $region36: #{tpu_custom_call.1} parent=11 // pred_fallthru
          _
        // Predicated region
        $region37: #{tpu_custom_call.1} parent=11 // pred_check
          %p249 = pneg %p190
        $region38: #{tpu_custom_call.1} parent=11 // pred_check_branch
          %251 = sbr.rel (%p249) target = $region40
        $region39: #{tpu_custom_call.1} parent=11 // pred_region
          _
        $region40: #{tpu_custom_call.1} parent=11 // pred_fallthru
          _
      $region12: #{tpu_custom_call.1} parent=5 // pred_fallthru
        _
      %p252 = scmp.lt.s32.totalorder %s17, 2
      // Predicated region
      $region41: #{tpu_custom_call.1} parent=5 // pred_check
        %p253 = pneg %p252
      $region42: #{tpu_custom_call.1} parent=5 // pred_check_branch
        %255 = sbr.rel (%p253) target = $region44
      $region43: #{tpu_custom_call.1} parent=5 // pred_region
        // Predicated region
        $region45: #{tpu_custom_call.1} parent=43 // pred_check
          %p256 = pneg %p37
        $region46: #{tpu_custom_call.1} parent=43 // pred_check_branch
          %258 = sbr.rel (%p256) target = $region48
        $region47: #{tpu_custom_call.1} parent=43 // pred_region
          %s259 = smul.u32 2, %s17
          %p260 = scmp.lt.s32.totalorder %s259, 3
          %s261 = scalar_select %p260, %s259, 3
          %s262 = smul.addr %s261, 8
          %s263 = scalar_lea.vmem %s0, %s262
          %s264 = smul.u32 2, %s17
        $region48: #{tpu_custom_call.1} parent=43 // pred_fallthru
          _
      $region44: #{tpu_custom_call.1} parent=5 // pred_fallthru
        _
      %p265 = scmp.le.s32.totalorder 1, %s17
      %p266 = scmp.lt.s32.totalorder %s17, 3
      %p267 = pnand %p265, %p266
      %p268 = pneg %p267
      // Predicated region
      $region49: #{tpu_custom_call.1} parent=5 // pred_check
        _
      $region50: #{tpu_custom_call.1} parent=5 // pred_check_branch
        %270 = sbr.rel (%p267) target = $region52
      $region51: #{tpu_custom_call.1} parent=5 // pred_region
        %s271 = ssub.s32 %s17, 1
        %s272 = smul.u32 2, %s22
        %p273 = scmp.lt.s32.totalorder %s272, 3
        %s274 = scalar_select %p273, %s272, 3
        %s275 = smul.addr %s274, 8
        %s276 = scalar_lea.vmem %s0, %s275
        %p277 = pneg %p43
        %p278 = pneg %p40
        %p279 = pneg %p64
        %p280 = pneg %p61
        %p281 = pneg %p85
        %p282 = pneg %p82
        %p283 = pneg %p106
        %p284 = pneg %p103
        %p285 = pneg %p127
        %p286 = pneg %p124
        %p287 = pneg %p148
        %p288 = pneg %p145
        %p289 = pneg %p169
        %p290 = pneg %p166
        %p291 = pneg %p190
        %p292 = pneg %p187
        %p293 = pneg %p216
        %p294 = pneg %p213
        %s295 = sand.u32 %s203, 1
        %s296 = scalar_lea.sflag [#allocation4], %s295
        %s297 = sand.u32 %s203, 1
        %s298 = smul.addr %s297, 64
        %s299 = scalar_lea.vmem [#allocation3], %s298
        %s300 = smul.u32 2, %s22
        %p301 = scmp.lt.s32.totalorder %s300, 3
        %s302 = scalar_select %p301, %s300, 3
        %s303 = smul.addr %s302, 8
        %s304 = scalar_lea.vmem %s0, %s303
        %s305 = smul.u32 2, %s22
        %s306 = smul.u32 2, %s22
        %v307 = vld [vmem:[%s4] sm:$0xff]
        %v308 = vld [vmem:[%s4 + $0x8] sm:$0xff]
        %v309 = vld [vmem:[%s4 + $0x10] sm:$0xff]
        %v310 = vld [vmem:[%s4 + $0x18] sm:$0xff]
        %v311 = vld [vmem:[%s4 + $0x20] sm:$0xff]
        %v312 = vld [vmem:[%s4 + $0x28] sm:$0xff]
        %v313 = vld [vmem:[%s4 + $0x30] sm:$0xff]
        %v314 = vld [vmem:[%s4 + $0x38] sm:$0xff]
        %v315 = vld [vmem:[%s4 + $0x40] sm:$0xff]
        %v316 = vld [vmem:[%s4 + $0x48] sm:$0xff]
        %v317 = vld [vmem:[%s4 + $0x50] sm:$0xff]
        %v318 = vld [vmem:[%s4 + $0x58] sm:$0xff]
        %v319 = vld [vmem:[%s4 + $0x60] sm:$0xff]
        %v320 = vld [vmem:[%s4 + $0x68] sm:$0xff]
        %v321 = vld [vmem:[%s4 + $0x70] sm:$0xff]
        %v322 = vld [vmem:[%s4 + $0x78] sm:$0xff]
        %v323 = vld [vmem:[%s4 + $0x80] sm:$0xff]
        %v324 = vld [vmem:[%s4 + $0x88] sm:$0xff]
        %v325 = vld [vmem:[%s4 + $0x90] sm:$0xff]
        %v326 = vld [vmem:[%s4 + $0x98] sm:$0xff]
        %v327 = vld [vmem:[%s4 + $0xa0] sm:$0xff]
        %v328 = vld [vmem:[%s4 + $0xa8] sm:$0xff]
        %v329 = vld [vmem:[%s4 + $0xb0] sm:$0xff]
        %v330 = vld [vmem:[%s4 + $0xb8] sm:$0xff]
        %v331 = vld [vmem:[%s4 + $0xc0] sm:$0xff]
        %v332 = vld [vmem:[%s4 + $0xc8] sm:$0xff]
        %v333 = vld [vmem:[%s4 + $0xd0] sm:$0xff]
        %v334 = vld [vmem:[%s4 + $0xd8] sm:$0xff]
        %v335 = vld [vmem:[%s304] sm:$0xff]
        %v336 = vld [vmem:[%s304 + $0x8] sm:$0xff]
        %v337 = vld [vmem:[%s1] sm:$0xff]
        %v338 = vld [vmem:[%s1 + $0x8] sm:$0xff]
        %v339 = vld [vmem:[%s1 + $0x10] sm:$0xff]
        %v340 = vld [vmem:[%s1 + $0x18] sm:$0xff]
        %v341 = vld [vmem:[%s1 + $0x20] sm:$0xff]
        %v342 = vld [vmem:[%s1 + $0x28] sm:$0xff]
        %344 = vset.pattern.permute.xlu0 0
        %345 = vperm.xlu0 %344, %v307
        %v346 = vpop.permute.xlu0 %345
        %349 = vset.pattern.permute.xlu0 0
        %350 = vperm.xlu0 %349, %v308
        %v351 = vpop.permute.xlu0 %350
        %354 = vset.pattern.permute.xlu0 0
        %355 = vperm.xlu0 %354, %v309
        %v356 = vpop.permute.xlu0 %355
        %359 = vset.pattern.permute.xlu0 0
        %360 = vperm.xlu0 %359, %v310
        %v361 = vpop.permute.xlu0 %360
        %364 = vset.pattern.permute.xlu0 0
        %365 = vperm.xlu0 %364, %v311
        %v366 = vpop.permute.xlu0 %365
        %369 = vset.pattern.permute.xlu0 0
        %370 = vperm.xlu0 %369, %v312
        %v371 = vpop.permute.xlu0 %370
        %vm373 = vcmask 64512
        %v375 = vsel %vm373, %v337, 0
        %v378 = vsel %vm373, %v338, 0
        %v381 = vsel %vm373, %v339, 0
        %v384 = vsel %vm373, %v340, 0
        %v387 = vsel %vm373, %v341, 0
        %v390 = vsel %vm373, %v342, 0
        %392 = vmatprep.subr.mxu0 %v336
        %393 = vmatpush1.msra.mxu0 %v335
        %394 = vmatprep.subr.mxu0 0.0
        %395 = vmatpush1.msra.mxu0 0.0
        %396 = vmatprep.subr.mxu0 0.0
        %397 = vmatpush1.msra.mxu0 0.0
        %398 = vmatprep.subr.mxu0 0.0
        %399 = vmatpush1.msra.mxu0 0.0
        %400 = vmatprep.subr.mxu0 0.0
        %401 = vmatpush1.msra.mxu0 0.0
        %402 = vmatprep.subr.mxu0 0.0
        %403 = vmatpush1.msra.mxu0 0.0
        %404 = vmatprep.subr.mxu0 0.0
        %405 = vmatpush1.msra.mxu0 0.0
        %406 = vmatprep.subr.mxu0 0.0
        %407 = vmatpush1.msra.mxu0 0.0
        %408 = vmatprep.subr.mxu0 0.0
        %409 = vmatpush1.msra.mxu0 0.0
        %410 = vmatprep.subr.mxu0 0.0
        %411 = vmatpush1.msra.mxu0 0.0
        %412 = vmatprep.subr.mxu0 0.0
        %413 = vmatpush1.msra.mxu0 0.0
        %414 = vmatprep.subr.mxu0 0.0
        %415 = vmatpush1.msra.mxu0 0.0
        %416 = vmatprep.subr.mxu0 0.0
        %417 = vmatpush1.msra.mxu0 0.0
        %418 = vmatprep.subr.mxu0 0.0
        %419 = vmatpush1.msra.mxu0 0.0
        %420 = vmatprep.subr.mxu0 0.0
        %421 = vmatpush1.msra.mxu0 0.0
        %422 = vmatprep.subr.mxu0 0.0
        %423 = vmatpush1.msra.mxu0 0.0
        %424 = vmatprep.subr.mxu0 0.0
        %425 = vmatpush1.msra.mxu0 0.0
        %426 = vmatprep.subr.mxu0 0.0
        %427 = vmatpush1.msra.mxu0 0.0
        %428 = vmatprep.subr.mxu0 0.0
        %429 = vmatpush1.msra.mxu0 0.0
        %430 = vmatprep.subr.mxu0 0.0
        %431 = vmatpush1.msra.mxu0 0.0
        %432 = vmatprep.subr.mxu0 0.0
        %433 = vmatpush1.msra.mxu0 0.0
        %434 = vmatprep.subr.mxu0 0.0
        %435 = vmatpush1.msra.mxu0 0.0
        %436 = vmatprep.subr.mxu0 0.0
        %437 = vmatpush1.msra.mxu0 0.0
        %438 = vmatprep.subr.mxu0 0.0
        %439 = vmatpush1.msra.mxu0 0.0
        %440 = vmatprep.subr.mxu0 0.0
        %441 = vmatpush1.msra.mxu0 0.0
        %442 = vmatprep.subr.mxu0 0.0
        %443 = vmatpush1.msra.mxu0 0.0
        %444 = vmatprep.subr.mxu0 0.0
        %445 = vmatpush1.msra.mxu0 0.0
        %446 = vmatprep.subr.mxu0 0.0
        %447 = vmatpush1.msra.mxu0 0.0
        %448 = vmatprep.subr.mxu0 0.0
        %449 = vmatpush1.msra.mxu0 0.0
        %450 = vmatprep.subr.mxu0 0.0
        %451 = vmatpush1.msra.mxu0 0.0
        %452 = vmatprep.subr.mxu0 0.0
        %453 = vmatpush1.msra.mxu0 0.0
        %454 = vmatprep.subr.mxu0 0.0
        %455 = vmatpush1.msra.mxu0 0.0
        %456 = vmatprep.mubr.f32.mxu0 0.0
        %457 = vmatmul.mubr.f32.gmra.mrb[0].mxu0 %v375
        %v458 = vpop.f32.mrb[0].mxu0
        %v459 = vadd.f32 %v346, %v458
        %v460 = vpop.f32.mrb[0].mxu0
        %v461 = vadd.f32 %v346, %v460
        %462 = vmatprep.mubr.f32.mxu0 0.0
        %463 = vmatmul.mubr.f32.gmra.mrb[0].mxu0 %v378
        %v464 = vpop.f32.mrb[0].mxu0
        %v465 = vadd.f32 %v351, %v464
        %v466 = vpop.f32.mrb[0].mxu0
        %v467 = vadd.f32 %v351, %v466
        %468 = vmatprep.mubr.f32.mxu0 0.0
        %469 = vmatmul.mubr.f32.gmra.mrb[0].mxu0 %v381
        %v470 = vpop.f32.mrb[0].mxu0
        %v471 = vadd.f32 %v356, %v470
        %v472 = vpop.f32.mrb[0].mxu0
        %v473 = vadd.f32 %v356, %v472
        %474 = vmatprep.mubr.f32.mxu0 0.0
        %475 = vmatmul.mubr.f32.gmra.mrb[0].mxu0 %v384
        %v476 = vpop.f32.mrb[0].mxu0
        %v477 = vadd.f32 %v361, %v476
        %v478 = vpop.f32.mrb[0].mxu0
        %v479 = vadd.f32 %v361, %v478
        %480 = vmatprep.mubr.f32.mxu0 0.0
        %481 = vmatmul.mubr.f32.gmra.mrb[0].mxu0 %v387
        %v482 = vpop.f32.mrb[0].mxu0
        %v483 = vadd.f32 %v366, %v482
        %v484 = vpop.f32.mrb[0].mxu0
        %v485 = vadd.f32 %v366, %v484
        %486 = vmatprep.mubr.f32.mxu0 0.0
        %487 = vmatmul.mubr.f32.gmra.mrb[0].mxu0 %v390
        %v488 = vpop.f32.mrb[0].mxu0
        %v489 = vadd.f32 %v371, %v488
        %v490 = vpop.f32.mrb[0].mxu0
        %v491 = vadd.f32 %v371, %v490
        %492 = vdwg.mxu0
        %493 = vst [vmem:[%s299] sm:$0xff] %v471
        %494 = vst [vmem:[%s299 + $0x8] sm:$0xff] %v473
        %495 = vst [vmem:[%s299 + $0x10] sm:$0xff] %v477
        %496 = vst [vmem:[%s299 + $0x18] sm:$0xff] %v479
        %497 = vst [vmem:[%s299 + $0x20] sm:$0xff] %v483
        %498 = vst [vmem:[%s299 + $0x28] sm:$0xff] %v485
        %499 = vst [vmem:[%s299 + $0x30] sm:$0xff] %v489
        %500 = vst [vmem:[%s299 + $0x38] sm:$0xff] %v491
        %v501 = vld [vmem:[%s5] sm:$0xff]
        %v502 = vld [vmem:[%s5 + $0x8] sm:$0xff]
        %v503 = vadd.f32 %v459, %v461
        %504 = vadd.xlane.f32.xlu0 %v503
        %v505 = vpop.xlane.xlu0 %504
        %v506 = vadd.f32 %v465, %v467
        %507 = vadd.xlane.f32.xlu0 %v506
        %v508 = vpop.xlane.xlu0 %507
        %vm509 = vcmask 130048
        %v511 = vsel %vm509, %v501, 0
        %v514 = vsel %vm509, %v502, 0
        %516 = vmatprep.subr.mxu0 0.0
        %517 = vmatpush1.msra.mxu0 %v505
        %518 = vmatprep.subr.mxu0 0.0
        %519 = vmatpush1.msra.mxu0 %v508
        %520 = vmatprep.subr.mxu0 0.0
        %521 = vmatpush1.msra.mxu0 0.0
        %522 = vmatprep.subr.mxu0 0.0
        %523 = vmatpush1.msra.mxu0 0.0
        %524 = vmatprep.subr.mxu0 0.0
        %525 = vmatpush1.msra.mxu0 0.0
        %526 = vmatprep.subr.mxu0 0.0
        %527 = vmatpush1.msra.mxu0 0.0
        %528 = vmatprep.subr.mxu0 0.0
        %529 = vmatpush1.msra.mxu0 0.0
        %530 = vmatprep.subr.mxu0 0.0
        %531 = vmatpush1.msra.mxu0 0.0
        %532 = vmatprep.subr.mxu0 0.0
        %533 = vmatpush1.msra.mxu0 0.0
        %534 = vmatprep.subr.mxu0 0.0
        %535 = vmatpush1.msra.mxu0 0.0
        %536 = vmatprep.subr.mxu0 0.0
        %537 = vmatpush1.msra.mxu0 0.0
        %538 = vmatprep.subr.mxu0 0.0
        %539 = vmatpush1.msra.mxu0 0.0
        %540 = vmatprep.subr.mxu0 0.0
        %541 = vmatpush1.msra.mxu0 0.0
        %542 = vmatprep.subr.mxu0 0.0
        %543 = vmatpush1.msra.mxu0 0.0
        %544 = vmatprep.subr.mxu0 0.0
        %545 = vmatpush1.msra.mxu0 0.0
        %546 = vmatprep.subr.mxu0 0.0
        %547 = vmatpush1.msra.mxu0 0.0
        %548 = vmatprep.subr.mxu0 0.0
        %549 = vmatpush1.msra.mxu0 0.0
        %550 = vmatprep.subr.mxu0 0.0
        %551 = vmatpush1.msra.mxu0 0.0
        %552 = vmatprep.subr.mxu0 0.0
        %553 = vmatpush1.msra.mxu0 0.0
        %554 = vmatprep.subr.mxu0 0.0
        %555 = vmatpush1.msra.mxu0 0.0
        %556 = vmatprep.subr.mxu0 0.0
        %557 = vmatpush1.msra.mxu0 0.0
        %558 = vmatprep.subr.mxu0 0.0
        %559 = vmatpush1.msra.mxu0 0.0
        %560 = vmatprep.subr.mxu0 0.0
        %561 = vmatpush1.msra.mxu0 0.0
        %562 = vmatprep.subr.mxu0 0.0
        %563 = vmatpush1.msra.mxu0 0.0
        %564 = vmatprep.subr.mxu0 0.0
        %565 = vmatpush1.msra.mxu0 0.0
        %566 = vmatprep.subr.mxu0 0.0
        %567 = vmatpush1.msra.mxu0 0.0
        %568 = vmatprep.subr.mxu0 0.0
        %569 = vmatpush1.msra.mxu0 0.0
        %570 = vmatprep.subr.mxu0 0.0
        %571 = vmatpush1.msra.mxu0 0.0
        %572 = vmatprep.subr.mxu0 0.0
        %573 = vmatpush1.msra.mxu0 0.0
        %574 = vmatprep.subr.mxu0 0.0
        %575 = vmatpush1.msra.mxu0 0.0
        %576 = vmatprep.subr.mxu0 0.0
        %577 = vmatpush1.msra.mxu0 0.0
        %578 = vmatprep.subr.mxu0 0.0
        %579 = vmatpush1.msra.mxu0 0.0
        %580 = vmatprep.mubr.f32.mxu0 0.0
        %581 = vmatmul.mubr.f32.gmra.mrb[0].mxu0 %v511
        %v582 = vpop.f32.mrb[0].mxu0
        %v583 = vadd.f32 0.0, %v582
        %v584 = vpop.f32.mrb[0].mxu0
        %585 = vmatprep.mubr.f32.mxu0 0.0
        %586 = vmatmul.mubr.f32.gmra.mrb[0].mxu0 %v514
        %v587 = vpop.f32.mrb[0].mxu0
        %v588 = vadd.f32 0.0, %v587
        %v589 = vpop.f32.mrb[0].mxu0
        %590 = vdwg.mxu0
        %v591 = vmul.f32 %v583, 0.00048828125
        %v592 = vmul.f32 %v588, 0.00048828125
        %594 = vset.pattern.permute.xlu0 0
        %595 = vperm.xlu0 %594, %v591
        %v596 = vpop.permute.xlu0 %595
        %599 = vset.pattern.permute.xlu0 0
        %600 = vperm.xlu0 %599, %v592
        %v601 = vpop.permute.xlu0 %600
        %v603 = vsub.f32 %v459, %v596
        %v604 = vsub.f32 %v461, %v596
        %v605 = vsub.f32 %v465, %v601
        %v606 = vsub.f32 %v467, %v601
        %v607 = vmul.f32 %v603, %v603
        %v608 = vmul.f32 %v604, %v604
        %v609 = vmul.f32 %v605, %v605
        %v610 = vmul.f32 %v606, %v606
        %v611 = vadd.f32 %v607, %v608
        %612 = vadd.xlane.f32.xlu0 %v611
        %v613 = vpop.xlane.xlu0 %612
        %v614 = vadd.f32 %v609, %v610
        %615 = vadd.xlane.f32.xlu0 %v614
        %v616 = vpop.xlane.xlu0 %615
        %617 = vmatprep.subr.mxu0 0.0
        %618 = vmatpush1.msra.mxu0 %v613
        %619 = vmatprep.subr.mxu0 0.0
        %620 = vmatpush1.msra.mxu0 %v616
        %621 = vmatprep.subr.mxu0 0.0
        %622 = vmatpush1.msra.mxu0 0.0
        %623 = vmatprep.subr.mxu0 0.0
        %624 = vmatpush1.msra.mxu0 0.0
        %625 = vmatprep.subr.mxu0 0.0
        %626 = vmatpush1.msra.mxu0 0.0
        %627 = vmatprep.subr.mxu0 0.0
        %628 = vmatpush1.msra.mxu0 0.0
        %629 = vmatprep.subr.mxu0 0.0
        %630 = vmatpush1.msra.mxu0 0.0
        %631 = vmatprep.subr.mxu0 0.0
        %632 = vmatpush1.msra.mxu0 0.0
        %633 = vmatprep.subr.mxu0 0.0
        %634 = vmatpush1.msra.mxu0 0.0
        %635 = vmatprep.subr.mxu0 0.0
        %636 = vmatpush1.msra.mxu0 0.0
        %637 = vmatprep.subr.mxu0 0.0
        %638 = vmatpush1.msra.mxu0 0.0
        %639 = vmatprep.subr.mxu0 0.0
        %640 = vmatpush1.msra.mxu0 0.0
        %641 = vmatprep.subr.mxu0 0.0
        %642 = vmatpush1.msra.mxu0 0.0
        %643 = vmatprep.subr.mxu0 0.0
        %644 = vmatpush1.msra.mxu0 0.0
        %645 = vmatprep.subr.mxu0 0.0
        %646 = vmatpush1.msra.mxu0 0.0
        %647 = vmatprep.subr.mxu0 0.0
        %648 = vmatpush1.msra.mxu0 0.0
        %649 = vmatprep.subr.mxu0 0.0
        %650 = vmatpush1.msra.mxu0 0.0
        %651 = vmatprep.subr.mxu0 0.0
        %652 = vmatpush1.msra.mxu0 0.0
        %653 = vmatprep.subr.mxu0 0.0
        %654 = vmatpush1.msra.mxu0 0.0
        %655 = vmatprep.subr.mxu0 0.0
        %656 = vmatpush1.msra.mxu0 0.0
        %657 = vmatprep.subr.mxu0 0.0
        %658 = vmatpush1.msra.mxu0 0.0
        %659 = vmatprep.subr.mxu0 0.0
        %660 = vmatpush1.msra.mxu0 0.0
        %661 = vmatprep.subr.mxu0 0.0
        %662 = vmatpush1.msra.mxu0 0.0
        %663 = vmatprep.subr.mxu0 0.0
        %664 = vmatpush1.msra.mxu0 0.0
        %665 = vmatprep.subr.mxu0 0.0
        %666 = vmatpush1.msra.mxu0 0.0
        %667 = vmatprep.subr.mxu0 0.0
        %668 = vmatpush1.msra.mxu0 0.0
        %669 = vmatprep.subr.mxu0 0.0
        %670 = vmatpush1.msra.mxu0 0.0
        %671 = vmatprep.subr.mxu0 0.0
        %672 = vmatpush1.msra.mxu0 0.0
        %673 = vmatprep.subr.mxu0 0.0
        %674 = vmatpush1.msra.mxu0 0.0
        %675 = vmatprep.subr.mxu0 0.0
        %676 = vmatpush1.msra.mxu0 0.0
        %677 = vmatprep.subr.mxu0 0.0
        %678 = vmatpush1.msra.mxu0 0.0
        %679 = vmatprep.subr.mxu0 0.0
        %680 = vmatpush1.msra.mxu0 0.0
        %681 = vmatprep.mubr.f32.mxu0 0.0
        %682 = vmatmul.mubr.f32.gmra.mrb[0].mxu0 %v511
        %v683 = vpop.f32.mrb[0].mxu0
        %v684 = vadd.f32 0.0, %v683
        %v685 = vpop.f32.mrb[0].mxu0
        %686 = vmatprep.mubr.f32.mxu0 0.0
        %687 = vmatmul.mubr.f32.gmra.mrb[0].mxu0 %v514
        %v688 = vpop.f32.mrb[0].mxu0
        %v689 = vadd.f32 0.0, %v688
        %v690 = vpop.f32.mrb[0].mxu0
        %691 = vdwg.mxu0
        %v692 = vmul.f32 %v684, 0.00048828125
        %v693 = vmul.f32 %v689, 0.00048828125
        %v694 = vadd.f32 %v692, 1e-05
        %v695 = vadd.f32 %v693, 1e-05
        %v696 = vrsqrt.pop %v694
        %v697 = vrsqrt.pop %v695
        %699 = vset.pattern.permute.xlu0 0
        %700 = vperm.xlu0 %699, %v696
        %v701 = vpop.permute.xlu0 %700
        %704 = vset.pattern.permute.xlu0 0
        %705 = vperm.xlu0 %704, %v697
        %v706 = vpop.permute.xlu0 %705
        %v708 = vmul.f32 %v603, %v701
        %v709 = vmul.f32 %v604, %v701
        %v710 = vmul.f32 %v605, %v706
        %v711 = vmul.f32 %v606, %v706
        %713 = vset.pattern.permute.xlu0 0
        %714 = vperm.xlu0 %713, %v313
        %v715 = vpop.permute.xlu0 %714
        %718 = vset.pattern.permute.xlu0 0
        %719 = vperm.xlu0 %718, %v314
        %v720 = vpop.permute.xlu0 %719
        %v722 = vmul.f32 %v708, %v715
        %v723 = vmul.f32 %v709, %v715
        %v724 = vmul.f32 %v710, %v720
        %v725 = vmul.f32 %v711, %v720
        %727 = vset.pattern.permute.xlu0 0
        %728 = vperm.xlu0 %727, %v315
        %v729 = vpop.permute.xlu0 %728
        %732 = vset.pattern.permute.xlu0 0
        %733 = vperm.xlu0 %732, %v316
        %v734 = vpop.permute.xlu0 %733
        %v736 = vadd.f32 %v722, %v729
        %v737 = vadd.f32 %v723, %v729
        %v738 = vadd.f32 %v724, %v734
        %v739 = vadd.f32 %v725, %v734
        %v740 = vmax.f32 %v736, 0.0
        %v741 = vmax.f32 %v737, 0.0
        %v742 = vmax.f32 %v738, 0.0
        %v743 = vmax.f32 %v739, 0.0
        %744 = vrot.lane.b32.xlu0 %v740, 17
        %v745 = vpop.permute.xlu0 %744
        %746 = vrot.lane.b32.xlu0 %v742, 17
        %v747 = vpop.permute.xlu0 %746
        %748 = vrot.lane.b32.xlu0 %v741, 17
        %v749 = vpop.permute.xlu0 %748
        %750 = vrot.lane.b32.xlu0 %v743, 17
        %v751 = vpop.permute.xlu0 %750
        %v752 = vlaneseq
        %v753 = vand.u32 %v752, 127
        %vm754 = vcmp.lt.s32.totalorder %v753, 17
        %v755 = vsel %vm754, %v745, %v749
        %v756 = vsel %vm754, %v747, %v751
        %v757 = vsel %vm754, %v749, %v745
        %v758 = vsel %vm754, %v751, %v747
        %v759 = vld [vmem:[%s7] ss:$8 sm:$0x3]
        %v761 = vlaneseq
        %v762 = vshrl.u32 %v761, 7
        %v763 = vsub.s32 0, %v762
        %v764 = vrot.slane %v759, %v763
        %v765 = vlaneseq
        %v766 = vshrl.u32 %v765, 7
        %v767 = vsub.s32 1, %v766
        %v768 = vrot.slane %v759, %v767
        %v771 = vmul.f32 %v757, %v764
        %v772 = vmul.f32 %v755, %v768
        %v773 = vmul.f32 %v758, %v764
        %v774 = vmul.f32 %v756, %v768
        %775 = vst [vmem:[#allocation2] sm:$0xff] %v771
        %776 = vst [vmem:[#allocation2 + $0x8] sm:$0xff] %v772
        %777 = vst [vmem:[#allocation2 + $0x10] sm:$0xff] %v773
        %778 = vst [vmem:[#allocation2 + $0x18] sm:$0xff] %v774
        %779 = vrot.lane.b32.xlu0 %v740, 16
        %v780 = vpop.permute.xlu0 %779
        %781 = vrot.lane.b32.xlu0 %v742, 16
        %v782 = vpop.permute.xlu0 %781
        %783 = vrot.lane.b32.xlu0 %v741, 16
        %v784 = vpop.permute.xlu0 %783
        %785 = vrot.lane.b32.xlu0 %v743, 16
        %v786 = vpop.permute.xlu0 %785
        %vm787 = vcmp.lt.s32.totalorder %v753, 16
        %v788 = vsel %vm787, %v780, %v784
        %v789 = vsel %vm787, %v782, %v786
        %v790 = vsel %vm787, %v784, %v780
        %v791 = vsel %vm787, %v786, %v782
        %s792 = scalar_lea.vmem %s7, 1
        %v793 = vld [vmem:[%s792] ss:$8 sm:$0x3]
        %v795 = vlaneseq
        %v796 = vshrl.u32 %v795, 7
        %v797 = vsub.s32 0, %v796
        %v798 = vrot.slane %v793, %v797
        %v799 = vlaneseq
        %v800 = vshrl.u32 %v799, 7
        %v801 = vsub.s32 1, %v800
        %v802 = vrot.slane %v793, %v801
        %v805 = vmul.f32 %v790, %v798
        %v806 = vmul.f32 %v788, %v802
        %v807 = vmul.f32 %v791, %v798
        %v808 = vmul.f32 %v789, %v802
        %809 = vst [vmem:[#allocation2 + $0x20] sm:$0xff] %v805
        %810 = vst [vmem:[#allocation2 + $0x28] sm:$0xff] %v806
        %811 = vst [vmem:[#allocation2 + $0x30] sm:$0xff] %v807
        %812 = vst [vmem:[#allocation2 + $0x38] sm:$0xff] %v808
        %813 = vrot.lane.b32.xlu0 %v740, 15
        %v814 = vpop.permute.xlu0 %813
        %815 = vrot.lane.b32.xlu0 %v742, 15
        %v816 = vpop.permute.xlu0 %815
        %817 = vrot.lane.b32.xlu0 %v741, 15
        %v818 = vpop.permute.xlu0 %817
        %819 = vrot.lane.b32.xlu0 %v743, 15
        %v820 = vpop.permute.xlu0 %819
        %vm821 = vcmp.lt.s32.totalorder %v753, 15
        %v822 = vsel %vm821, %v814, %v818
        %v823 = vsel %vm821, %v816, %v820
        %v824 = vsel %vm821, %v818, %v814
        %v825 = vsel %vm821, %v820, %v816
        %s826 = scalar_lea.vmem %s7, 2
        %v827 = vld [vmem:[%s826] ss:$8 sm:$0x3]
        %v829 = vlaneseq
        %v830 = vshrl.u32 %v829, 7
        %v831 = vsub.s32 0, %v830
        %v832 = vrot.slane %v827, %v831
        %v833 = vlaneseq
        %v834 = vshrl.u32 %v833, 7
        %v835 = vsub.s32 1, %v834
        %v836 = vrot.slane %v827, %v835
        %v839 = vmul.f32 %v824, %v832
        %v840 = vmul.f32 %v822, %v836
        %v841 = vmul.f32 %v825, %v832
        %v842 = vmul.f32 %v823, %v836
        %843 = vst [vmem:[#allocation2 + $0x40] sm:$0xff] %v839
        %844 = vst [vmem:[#allocation2 + $0x48] sm:$0xff] %v840
        %845 = vst [vmem:[#allocation2 + $0x50] sm:$0xff] %v841
        %846 = vst [vmem:[#allocation2 + $0x58] sm:$0xff] %v842
        %847 = vrot.lane.b32.xlu0 %v740, 1
        %v848 = vpop.permute.xlu0 %847
        %849 = vrot.lane.b32.xlu0 %v742, 1
        %v850 = vpop.permute.xlu0 %849
        %851 = vrot.lane.b32.xlu0 %v741, 1
        %v852 = vpop.permute.xlu0 %851
        %853 = vrot.lane.b32.xlu0 %v743, 1
        %v854 = vpop.permute.xlu0 %853
        %vm855 = vcmp.lt.s32.totalorder %v753, 1
        %v856 = vsel %vm855, %v848, %v852
        %v857 = vsel %vm855, %v850, %v854
        %v858 = vsel %vm855, %v852, %v848
        %v859 = vsel %vm855, %v854, %v850
        %s860 = scalar_lea.vmem %s7, 3
        %v861 = vld [vmem:[%s860] ss:$8 sm:$0x3]
        %v863 = vlaneseq
        %v864 = vshrl.u32 %v863, 7
        %v865 = vsub.s32 0, %v864
        %v866 = vrot.slane %v861, %v865
        %v867 = vlaneseq
        %v868 = vshrl.u32 %v867, 7
        %v869 = vsub.s32 1, %v868
        %v870 = vrot.slane %v861, %v869
        %v873 = vmul.f32 %v858, %v866
        %v874 = vmul.f32 %v856, %v870
        %v875 = vmul.f32 %v859, %v866
        %v876 = vmul.f32 %v857, %v870
        %877 = vst [vmem:[#allocation2 + $0x60] sm:$0xff] %v873
        %878 = vst [vmem:[#allocation2 + $0x68] sm:$0xff] %v874
        %879 = vst [vmem:[#allocation2 + $0x70] sm:$0xff] %v875
        %880 = vst [vmem:[#allocation2 + $0x78] sm:$0xff] %v876
        %881 = vst [vmem:[#allocation2 + $0x80] sm:$0xff] %v740
        %882 = vst [vmem:[#allocation2 + $0x88] sm:$0xff] %v741
        %883 = vst [vmem:[#allocation2 + $0x90] sm:$0xff] %v742
        %884 = vst [vmem:[#allocation2 + $0x98] sm:$0xff] %v743
        %885 = vrot.lane.b32.xlu0 %v740, 127
        %v886 = vpop.permute.xlu0 %885
        %887 = vrot.lane.b32.xlu0 %v742, 127
        %v888 = vpop.permute.xlu0 %887
        %889 = vrot.lane.b32.xlu0 %v741, 127
        %v890 = vpop.permute.xlu0 %889
        %891 = vrot.lane.b32.xlu0 %v743, 127
        %v892 = vpop.permute.xlu0 %891
        %vm893 = vcmp.lt.s32.totalorder %v753, 127
        %v894 = vsel %vm893, %v886, %v890
        %v895 = vsel %vm893, %v888, %v892
        %v896 = vsel %vm893, %v890, %v886
        %v897 = vsel %vm893, %v892, %v888
        %s898 = scalar_lea.vmem %s7, 5
        %v899 = vld [vmem:[%s898] ss:$8 sm:$0x3]
        %v901 = vlaneseq
        %v902 = vshrl.u32 %v901, 7
        %v903 = vsub.s32 0, %v902
        %v904 = vrot.slane %v899, %v903
        %v905 = vlaneseq
        %v906 = vshrl.u32 %v905, 7
        %v907 = vsub.s32 1, %v906
        %v908 = vrot.slane %v899, %v907
        %v911 = vmul.f32 %v894, %v904
        %v912 = vmul.f32 %v896, %v908
        %v913 = vmul.f32 %v895, %v904
        %v914 = vmul.f32 %v897, %v908
        %915 = vst [vmem:[#allocation2 + $0xa0] sm:$0xff] %v911
        %916 = vst [vmem:[#allocation2 + $0xa8] sm:$0xff] %v912
        %917 = vst [vmem:[#allocation2 + $0xb0] sm:$0xff] %v913
        %918 = vst [vmem:[#allocation2 + $0xb8] sm:$0xff] %v914
        %919 = vrot.lane.b32.xlu0 %v740, 113
        %v920 = vpop.permute.xlu0 %919
        %921 = vrot.lane.b32.xlu0 %v742, 113
        %v922 = vpop.permute.xlu0 %921
        %923 = vrot.lane.b32.xlu0 %v741, 113
        %v924 = vpop.permute.xlu0 %923
        %925 = vrot.lane.b32.xlu0 %v743, 113
        %v926 = vpop.permute.xlu0 %925
        %vm927 = vcmp.lt.s32.totalorder %v753, 113
        %v928 = vsel %vm927, %v920, %v924
        %v929 = vsel %vm927, %v922, %v926
        %v930 = vsel %vm927, %v924, %v920
        %v931 = vsel %vm927, %v926, %v922
        %s932 = scalar_lea.vmem %s7, 6
        %v933 = vld [vmem:[%s932] ss:$8 sm:$0x3]
        %v935 = vlaneseq
        %v936 = vshrl.u32 %v935, 7
        %v937 = vsub.s32 0, %v936
        %v938 = vrot.slane %v933, %v937
        %v939 = vlaneseq
        %v940 = vshrl.u32 %v939, 7
        %v941 = vsub.s32 1, %v940
        %v942 = vrot.slane %v933, %v941
        %v945 = vmul.f32 %v928, %v938
        %v946 = vmul.f32 %v930, %v942
        %v947 = vmul.f32 %v929, %v938
        %v948 = vmul.f32 %v931, %v942
        %949 = vst [vmem:[#allocation2 + $0xc0] sm:$0xff] %v945
        %950 = vst [vmem:[#allocation2 + $0xc8] sm:$0xff] %v946
        %951 = vst [vmem:[#allocation2 + $0xd0] sm:$0xff] %v947
        %952 = vst [vmem:[#allocation2 + $0xd8] sm:$0xff] %v948
        %953 = vrot.lane.b32.xlu0 %v740, 112
        %v954 = vpop.permute.xlu0 %953
        %955 = vrot.lane.b32.xlu0 %v742, 112
        %v956 = vpop.permute.xlu0 %955
        %957 = vrot.lane.b32.xlu0 %v741, 112
        %v958 = vpop.permute.xlu0 %957
        %959 = vrot.lane.b32.xlu0 %v743, 112
        %v960 = vpop.permute.xlu0 %959
        %vm961 = vcmp.lt.s32.totalorder %v753, 112
        %v962 = vsel %vm961, %v954, %v958
        %v963 = vsel %vm961, %v956, %v960
        %v964 = vsel %vm961, %v958, %v954
        %v965 = vsel %vm961, %v960, %v956
        %s966 = scalar_lea.vmem %s7, 7
        %v967 = vld [vmem:[%s966] ss:$8 sm:$0x3]
        %v969 = vlaneseq
        %v970 = vshrl.u32 %v969, 7
        %v971 = vsub.s32 0, %v970
        %v972 = vrot.slane %v967, %v971
        %v973 = vlaneseq
        %v974 = vshrl.u32 %v973, 7
        %v975 = vsub.s32 1, %v974
        %v976 = vrot.slane %v967, %v975
        %v979 = vmul.f32 %v962, %v972
        %v980 = vmul.f32 %v964, %v976
        %v981 = vmul.f32 %v963, %v972
        %v982 = vmul.f32 %v965, %v976
        %983 = vst [vmem:[#allocation2 + $0xe0] sm:$0xff] %v979
        %984 = vst [vmem:[#allocation2 + $0xe8] sm:$0xff] %v980
        %985 = vst [vmem:[#allocation2 + $0xf0] sm:$0xff] %v981
        %986 = vst [vmem:[#allocation2 + $0xf8] sm:$0xff] %v982
        %987 = vrot.lane.b32.xlu0 %v740, 111
        %v988 = vpop.permute.xlu0 %987
        %989 = vrot.lane.b32.xlu0 %v742, 111
        %v990 = vpop.permute.xlu0 %989
        %991 = vrot.lane.b32.xlu0 %v741, 111
        %v992 = vpop.permute.xlu0 %991
        %993 = vrot.lane.b32.xlu0 %v743, 111
        %v994 = vpop.permute.xlu0 %993
        %vm995 = vcmp.lt.s32.totalorder %v753, 111
        %v996 = vsel %vm995, %v988, %v992
        %v997 = vsel %vm995, %v990, %v994
        %v998 = vsel %vm995, %v992, %v988
        %v999 = vsel %vm995, %v994, %v990
        %s1000 = scalar_lea.vmem %s7, 16
        %v1001 = vld [vmem:[%s1000] ss:$8 sm:$0x3]
        %v1003 = vlaneseq
        %v1004 = vshrl.u32 %v1003, 7
        %v1005 = vsub.s32 0, %v1004
        %v1006 = vrot.slane %v1001, %v1005
        %v1007 = vlaneseq
        %v1008 = vshrl.u32 %v1007, 7
        %v1009 = vsub.s32 1, %v1008
        %v1010 = vrot.slane %v1001, %v1009
        %v1013 = vmul.f32 %v996, %v1006
        %v1014 = vmul.f32 %v998, %v1010
        %v1015 = vmul.f32 %v997, %v1006
        %v1016 = vmul.f32 %v999, %v1010
        %1017 = vst [vmem:[#allocation2 + $0x100] sm:$0xff] %v1013
        %1018 = vst [vmem:[#allocation2 + $0x108] sm:$0xff] %v1014
        %1019 = vst [vmem:[#allocation2 + $0x110] sm:$0xff] %v1015
        %1020 = vst [vmem:[#allocation2 + $0x118] sm:$0xff] %v1016
        %v1021 = vld [vmem:[%s2] sm:$0xff]
        %v1022 = vld [vmem:[%s2 + $0x8] sm:$0xff]
        %v1023 = vld [vmem:[%s2 + $0x10] sm:$0xff]
        %v1024 = vld [vmem:[%s2 + $0x18] sm:$0xff]
        %v1025 = vld [vmem:[#allocation2] sm:$0xff]
        %v1026 = vld [vmem:[#allocation2 + $0x8] sm:$0xff]
        %v1027 = vld [vmem:[#allocation2 + $0x10] sm:$0xff]
        %v1028 = vld [vmem:[#allocation2 + $0x18] sm:$0xff]
        %v1029 = vld [vmem:[#allocation2 + $0x20] sm:$0xff]
        %v1030 = vld [vmem:[#allocation2 + $0x28] sm:$0xff]
        %v1031 = vld [vmem:[#allocation2 + $0x30] sm:$0xff]
        %v1032 = vld [vmem:[#allocation2 + $0x38] sm:$0xff]
        %v1033 = vld [vmem:[#allocation2 + $0x40] sm:$0xff]
        %v1034 = vld [vmem:[#allocation2 + $0x48] sm:$0xff]
        %v1035 = vld [vmem:[#allocation2 + $0x50] sm:$0xff]
        %v1036 = vld [vmem:[#allocation2 + $0x58] sm:$0xff]
        %v1037 = vld [vmem:[#allocation2 + $0x60] sm:$0xff]
        %v1038 = vld [vmem:[#allocation2 + $0x68] sm:$0xff]
        %v1039 = vld [vmem:[#allocation2 + $0x70] sm:$0xff]
        %v1040 = vld [vmem:[#allocation2 + $0x78] sm:$0xff]
        %v1041 = vld [vmem:[#allocation2 + $0x80] sm:$0xff]
        %v1042 = vld [vmem:[#allocation2 + $0x88] sm:$0xff]
        %v1043 = vld [vmem:[#allocation2 + $0x90] sm:$0xff]
        %v1044 = vld [vmem:[#allocation2 + $0x98] sm:$0xff]
        %v1045 = vld [vmem:[#allocation2 + $0xa0] sm:$0xff]
        %v1046 = vld [vmem:[#allocation2 + $0xa8] sm:$0xff]
        %v1047 = vld [vmem:[#allocation2 + $0xb0] sm:$0xff]
        %v1048 = vld [vmem:[#allocation2 + $0xb8] sm:$0xff]
        %v1049 = vld [vmem:[#allocation2 + $0xc0] sm:$0xff]
        %v1050 = vld [vmem:[#allocation2 + $0xc8] sm:$0xff]
        %v1051 = vld [vmem:[#allocation2 + $0xd0] sm:$0xff]
        %v1052 = vld [vmem:[#allocation2 + $0xd8] sm:$0xff]
        %v1053 = vld [vmem:[#allocation2 + $0xe0] sm:$0xff]
        %v1054 = vld [vmem:[#allocation2 + $0xe8] sm:$0xff]
        %v1055 = vld [vmem:[#allocation2 + $0xf0] sm:$0xff]
        %v1056 = vld [vmem:[#allocation2 + $0xf8] sm:$0xff]
        %v1057 = vld [vmem:[#allocation2 + $0x100] sm:$0xff]
        %v1058 = vld [vmem:[#allocation2 + $0x108] sm:$0xff]
        %v1059 = vld [vmem:[#allocation2 + $0x110] sm:$0xff]
        %v1060 = vld [vmem:[#allocation2 + $0x118] sm:$0xff]
        %1062 = vset.pattern.permute.xlu0 0
        %1063 = vperm.xlu0 %1062, %v317
        %v1064 = vpop.permute.xlu0 %1063
        %1067 = vset.pattern.permute.xlu0 0
        %1068 = vperm.xlu0 %1067, %v318
        %v1069 = vpop.permute.xlu0 %1068
        %v1072 = vsel %vm509, %v1022, 0
        %v1075 = vsel %vm509, %v1024, 0
        %1077 = vmatprep.subr.mxu0 %v1026
        %1078 = vmatpush1.msra.mxu0 %v1025
        %1079 = vmatprep.subr.mxu0 %v1028
        %1080 = vmatpush1.msra.mxu0 %v1027
        %1081 = vmatprep.subr.mxu0 %v1030
        %1082 = vmatpush1.msra.mxu0 %v1029
        %1083 = vmatprep.subr.mxu0 %v1032
        %1084 = vmatpush1.msra.mxu0 %v1031
        %1085 = vmatprep.subr.mxu0 %v1034
        %1086 = vmatpush1.msra.mxu0 %v1033
        %1087 = vmatprep.subr.mxu0 %v1036
        %1088 = vmatpush1.msra.mxu0 %v1035
        %1089 = vmatprep.subr.mxu0 %v1038
        %1090 = vmatpush1.msra.mxu0 %v1037
        %1091 = vmatprep.subr.mxu0 %v1040
        %1092 = vmatpush1.msra.mxu0 %v1039
        %1093 = vmatprep.subr.mxu0 %v1042
        %1094 = vmatpush1.msra.mxu0 %v1041
        %1095 = vmatprep.subr.mxu0 %v1044
        %1096 = vmatpush1.msra.mxu0 %v1043
        %1097 = vmatprep.subr.mxu0 %v1046
        %1098 = vmatpush1.msra.mxu0 %v1045
        %1099 = vmatprep.subr.mxu0 %v1048
        %1100 = vmatpush1.msra.mxu0 %v1047
        %1101 = vmatprep.subr.mxu0 %v1050
        %1102 = vmatpush1.msra.mxu0 %v1049
        %1103 = vmatprep.subr.mxu0 %v1052
        %1104 = vmatpush1.msra.mxu0 %v1051
        %1105 = vmatprep.subr.mxu0 %v1054
        %1106 = vmatpush1.msra.mxu0 %v1053
        %1107 = vmatprep.subr.mxu0 %v1056
        %1108 = vmatpush1.msra.mxu0 %v1055
        %1109 = vmatprep.subr.mxu0 %v1058
        %1110 = vmatpush1.msra.mxu0 %v1057
        %1111 = vmatprep.subr.mxu0 %v1060
        %1112 = vmatpush1.msra.mxu0 %v1059
        %1113 = vmatprep.subr.mxu0 0.0
        %1114 = vmatpush1.msra.mxu0 0.0
        %1115 = vmatprep.subr.mxu0 0.0
        %1116 = vmatpush1.msra.mxu0 0.0
        %1117 = vmatprep.subr.mxu0 0.0
        %1118 = vmatpush1.msra.mxu0 0.0
        %1119 = vmatprep.subr.mxu0 0.0
        %1120 = vmatpush1.msra.mxu0 0.0
        %1121 = vmatprep.subr.mxu0 0.0
        %1122 = vmatpush1.msra.mxu0 0.0
        %1123 = vmatprep.subr.mxu0 0.0
        %1124 = vmatpush1.msra.mxu0 0.0
        %1125 = vmatprep.subr.mxu0 0.0
        %1126 = vmatpush1.msra.mxu0 0.0
        %1127 = vmatprep.subr.mxu0 0.0
        %1128 = vmatpush1.msra.mxu0 0.0
        %1129 = vmatprep.subr.mxu0 0.0
        %1130 = vmatpush1.msra.mxu0 0.0
        %1131 = vmatprep.subr.mxu0 0.0
        %1132 = vmatpush1.msra.mxu0 0.0
        %1133 = vmatprep.subr.mxu0 0.0
        %1134 = vmatpush1.msra.mxu0 0.0
        %1135 = vmatprep.subr.mxu0 0.0
        %1136 = vmatpush1.msra.mxu0 0.0
        %1137 = vmatprep.subr.mxu0 0.0
        %1138 = vmatpush1.msra.mxu0 0.0
        %1139 = vmatprep.subr.mxu0 0.0
        %1140 = vmatpush1.msra.mxu0 0.0
        %1141 = vmatprep.mubr.f32.mxu0 %v1072
        %1142 = vmatmul.mubr.f32.gmra.mrb[0].mxu0 %v1021
        %v1143 = vpop.f32.mrb[0].mxu0
        %v1144 = vadd.f32 %v1064, %v1143
        %v1145 = vpop.f32.mrb[0].mxu0
        %v1146 = vadd.f32 %v1064, %v1145
        %1147 = vmatprep.mubr.f32.mxu0 %v1075
        %1148 = vmatmul.mubr.f32.gmra.mrb[0].mxu0 %v1023
        %v1149 = vpop.f32.mrb[0].mxu0
        %v1150 = vadd.f32 %v1069, %v1149
        %v1151 = vpop.f32.mrb[0].mxu0
        %v1152 = vadd.f32 %v1069, %v1151
        %1153 = vdwg.mxu0
        %v1154 = vld [vmem:[%s5] sm:$0xff]
        %v1155 = vld [vmem:[%s5 + $0x8] sm:$0xff]
        %v1156 = vadd.f32 %v1144, %v1146
        %1157 = vadd.xlane.f32.xlu0 %v1156
        %v1158 = vpop.xlane.xlu0 %1157
        %v1159 = vadd.f32 %v1150, %v1152
        %1160 = vadd.xlane.f32.xlu0 %v1159
        %v1161 = vpop.xlane.xlu0 %1160
        %v1163 = vsel %vm509, %v1154, 0
        %v1166 = vsel %vm509, %v1155, 0
        %1168 = vmatprep.subr.mxu0 0.0
        %1169 = vmatpush1.msra.mxu0 %v1158
        %1170 = vmatprep.subr.mxu0 0.0
        %1171 = vmatpush1.msra.mxu0 %v1161
        %1172 = vmatprep.subr.mxu0 0.0
        %1173 = vmatpush1.msra.mxu0 0.0
        %1174 = vmatprep.subr.mxu0 0.0
        %1175 = vmatpush1.msra.mxu0 0.0
        %1176 = vmatprep.subr.mxu0 0.0
        %1177 = vmatpush1.msra.mxu0 0.0
        %1178 = vmatprep.subr.mxu0 0.0
        %1179 = vmatpush1.msra.mxu0 0.0
        %1180 = vmatprep.subr.mxu0 0.0
        %1181 = vmatpush1.msra.mxu0 0.0
        %1182 = vmatprep.subr.mxu0 0.0
        %1183 = vmatpush1.msra.mxu0 0.0
        %1184 = vmatprep.subr.mxu0 0.0
        %1185 = vmatpush1.msra.mxu0 0.0
        %1186 = vmatprep.subr.mxu0 0.0
        %1187 = vmatpush1.msra.mxu0 0.0
        %1188 = vmatprep.subr.mxu0 0.0
        %1189 = vmatpush1.msra.mxu0 0.0
        %1190 = vmatprep.subr.mxu0 0.0
        %1191 = vmatpush1.msra.mxu0 0.0
        %1192 = vmatprep.subr.mxu0 0.0
        %1193 = vmatpush1.msra.mxu0 0.0
        %1194 = vmatprep.subr.mxu0 0.0
        %1195 = vmatpush1.msra.mxu0 0.0
        %1196 = vmatprep.subr.mxu0 0.0
        %1197 = vmatpush1.msra.mxu0 0.0
        %1198 = vmatprep.subr.mxu0 0.0
        %1199 = vmatpush1.msra.mxu0 0.0
        %1200 = vmatprep.subr.mxu0 0.0
        %1201 = vmatpush1.msra.mxu0 0.0
        %1202 = vmatprep.subr.mxu0 0.0
        %1203 = vmatpush1.msra.mxu0 0.0
        %1204 = vmatprep.subr.mxu0 0.0
        %1205 = vmatpush1.msra.mxu0 0.0
        %1206 = vmatprep.subr.mxu0 0.0
        %1207 = vmatpush1.msra.mxu0 0.0
        %1208 = vmatprep.subr.mxu0 0.0
        %1209 = vmatpush1.msra.mxu0 0.0
        %1210 = vmatprep.subr.mxu0 0.0
        %1211 = vmatpush1.msra.mxu0 0.0
        %1212 = vmatprep.subr.mxu0 0.0
        %1213 = vmatpush1.msra.mxu0 0.0
        %1214 = vmatprep.subr.mxu0 0.0
        %1215 = vmatpush1.msra.mxu0 0.0
        %1216 = vmatprep.subr.mxu0 0.0
        %1217 = vmatpush1.msra.mxu0 0.0
        %1218 = vmatprep.subr.mxu0 0.0
        %1219 = vmatpush1.msra.mxu0 0.0
        %1220 = vmatprep.subr.mxu0 0.0
        %1221 = vmatpush1.msra.mxu0 0.0
        %1222 = vmatprep.subr.mxu0 0.0
        %1223 = vmatpush1.msra.mxu0 0.0
        %1224 = vmatprep.subr.mxu0 0.0
        %1225 = vmatpush1.msra.mxu0 0.0
        %1226 = vmatprep.subr.mxu0 0.0
        %1227 = vmatpush1.msra.mxu0 0.0
        %1228 = vmatprep.subr.mxu0 0.0
        %1229 = vmatpush1.msra.mxu0 0.0
        %1230 = vmatprep.subr.mxu0 0.0
        %1231 = vmatpush1.msra.mxu0 0.0
        %1232 = vmatprep.mubr.f32.mxu0 0.0
        %1233 = vmatmul.mubr.f32.gmra.mrb[0].mxu0 %v1163
        %v1234 = vpop.f32.mrb[0].mxu0
        %v1235 = vadd.f32 0.0, %v1234
        %v1236 = vpop.f32.mrb[0].mxu0
        %1237 = vmatprep.mubr.f32.mxu0 0.0
        %1238 = vmatmul.mubr.f32.gmra.mrb[0].mxu0 %v1166
        %v1239 = vpop.f32.mrb[0].mxu0
        %v1240 = vadd.f32 0.0, %v1239
        %v1241 = vpop.f32.mrb[0].mxu0
        %1242 = vdwg.mxu0
        %v1243 = vmul.f32 %v1235, 0.00048828125
        %v1244 = vmul.f32 %v1240, 0.00048828125
        %1246 = vset.pattern.permute.xlu0 0
        %1247 = vperm.xlu0 %1246, %v1243
        %v1248 = vpop.permute.xlu0 %1247
        %1251 = vset.pattern.permute.xlu0 0
        %1252 = vperm.xlu0 %1251, %v1244
        %v1253 = vpop.permute.xlu0 %1252
        %v1255 = vsub.f32 %v1144, %v1248
        %v1256 = vsub.f32 %v1146, %v1248
        %v1257 = vsub.f32 %v1150, %v1253
        %v1258 = vsub.f32 %v1152, %v1253
        %v1259 = vmul.f32 %v1255, %v1255
        %v1260 = vmul.f32 %v1256, %v1256
        %v1261 = vmul.f32 %v1257, %v1257
        %v1262 = vmul.f32 %v1258, %v1258
        %v1263 = vadd.f32 %v1259, %v1260
        %1264 = vadd.xlane.f32.xlu0 %v1263
        %v1265 = vpop.xlane.xlu0 %1264
        %v1266 = vadd.f32 %v1261, %v1262
        %1267 = vadd.xlane.f32.xlu0 %v1266
        %v1268 = vpop.xlane.xlu0 %1267
        %1269 = vmatprep.subr.mxu0 0.0
        %1270 = vmatpush1.msra.mxu0 %v1265
        %1271 = vmatprep.subr.mxu0 0.0
        %1272 = vmatpush1.msra.mxu0 %v1268
        %1273 = vmatprep.subr.mxu0 0.0
        %1274 = vmatpush1.msra.mxu0 0.0
        %1275 = vmatprep.subr.mxu0 0.0
        %1276 = vmatpush1.msra.mxu0 0.0
        %1277 = vmatprep.subr.mxu0 0.0
        %1278 = vmatpush1.msra.mxu0 0.0
        %1279 = vmatprep.subr.mxu0 0.0
        %1280 = vmatpush1.msra.mxu0 0.0
        %1281 = vmatprep.subr.mxu0 0.0
        %1282 = vmatpush1.msra.mxu0 0.0
        %1283 = vmatprep.subr.mxu0 0.0
        %1284 = vmatpush1.msra.mxu0 0.0
        %1285 = vmatprep.subr.mxu0 0.0
        %1286 = vmatpush1.msra.mxu0 0.0
        %1287 = vmatprep.subr.mxu0 0.0
        %1288 = vmatpush1.msra.mxu0 0.0
        %1289 = vmatprep.subr.mxu0 0.0
        %1290 = vmatpush1.msra.mxu0 0.0
        %1291 = vmatprep.subr.mxu0 0.0
        %1292 = vmatpush1.msra.mxu0 0.0
        %1293 = vmatprep.subr.mxu0 0.0
        %1294 = vmatpush1.msra.mxu0 0.0
        %1295 = vmatprep.subr.mxu0 0.0
        %1296 = vmatpush1.msra.mxu0 0.0
        %1297 = vmatprep.subr.mxu0 0.0
        %1298 = vmatpush1.msra.mxu0 0.0
        %1299 = vmatprep.subr.mxu0 0.0
        %1300 = vmatpush1.msra.mxu0 0.0
        %1301 = vmatprep.subr.mxu0 0.0
        %1302 = vmatpush1.msra.mxu0 0.0
        %1303 = vmatprep.subr.mxu0 0.0
        %1304 = vmatpush1.msra.mxu0 0.0
        %1305 = vmatprep.subr.mxu0 0.0
        %1306 = vmatpush1.msra.mxu0 0.0
        %1307 = vmatprep.subr.mxu0 0.0
        %1308 = vmatpush1.msra.mxu0 0.0
        %1309 = vmatprep.subr.mxu0 0.0
        %1310 = vmatpush1.msra.mxu0 0.0
        %1311 = vmatprep.subr.mxu0 0.0
        %1312 = vmatpush1.msra.mxu0 0.0
        %1313 = vmatprep.subr.mxu0 0.0
        %1314 = vmatpush1.msra.mxu0 0.0
        %1315 = vmatprep.subr.mxu0 0.0
        %1316 = vmatpush1.msra.mxu0 0.0
        %1317 = vmatprep.subr.mxu0 0.0
        %1318 = vmatpush1.msra.mxu0 0.0
        %1319 = vmatprep.subr.mxu0 0.0
        %1320 = vmatpush1.msra.mxu0 0.0
        %1321 = vmatprep.subr.mxu0 0.0
        %1322 = vmatpush1.msra.mxu0 0.0
        %1323 = vmatprep.subr.mxu0 0.0
        %1324 = vmatpush1.msra.mxu0 0.0
        %1325 = vmatprep.subr.mxu0 0.0
        %1326 = vmatpush1.msra.mxu0 0.0
        %1327 = vmatprep.subr.mxu0 0.0
        %1328 = vmatpush1.msra.mxu0 0.0
        %1329 = vmatprep.subr.mxu0 0.0
        %1330 = vmatpush1.msra.mxu0 0.0
        %1331 = vmatprep.subr.mxu0 0.0
        %1332 = vmatpush1.msra.mxu0 0.0
        %1333 = vmatprep.mubr.f32.mxu0 0.0
        %1334 = vmatmul.mubr.f32.gmra.mrb[0].mxu0 %v1163
        %v1335 = vpop.f32.mrb[0].mxu0
        %v1336 = vadd.f32 0.0, %v1335
        %v1337 = vpop.f32.mrb[0].mxu0
        %1338 = vmatprep.mubr.f32.mxu0 0.0
        %1339 = vmatmul.mubr.f32.gmra.mrb[0].mxu0 %v1166
        %v1340 = vpop.f32.mrb[0].mxu0
        %v1341 = vadd.f32 0.0, %v1340
        %v1342 = vpop.f32.mrb[0].mxu0
        %1343 = vdwg.mxu0
        %v1344 = vmul.f32 %v1336, 0.00048828125
        %v1345 = vmul.f32 %v1341, 0.00048828125
        %v1346 = vadd.f32 %v1344, 1e-05
        %v1347 = vadd.f32 %v1345, 1e-05
        %v1348 = vrsqrt.pop %v1346
        %v1349 = vrsqrt.pop %v1347
        %1351 = vset.pattern.permute.xlu0 0
        %1352 = vperm.xlu0 %1351, %v1348
        %v1353 = vpop.permute.xlu0 %1352
        %1356 = vset.pattern.permute.xlu0 0
        %1357 = vperm.xlu0 %1356, %v1349
        %v1358 = vpop.permute.xlu0 %1357
        %v1360 = vmul.f32 %v1255, %v1353
        %v1361 = vmul.f32 %v1256, %v1353
        %v1362 = vmul.f32 %v1257, %v1358
        %v1363 = vmul.f32 %v1258, %v1358
        %1365 = vset.pattern.permute.xlu0 0
        %1366 = vperm.xlu0 %1365, %v319
        %v1367 = vpop.permute.xlu0 %1366
        %1370 = vset.pattern.permute.xlu0 0
        %1371 = vperm.xlu0 %1370, %v320
        %v1372 = vpop.permute.xlu0 %1371
        %v1374 = vmul.f32 %v1360, %v1367
        %v1375 = vmul.f32 %v1361, %v1367
        %v1376 = vmul.f32 %v1362, %v1372
        %v1377 = vmul.f32 %v1363, %v1372
        %1379 = vset.pattern.permute.xlu0 0
        %1380 = vperm.xlu0 %1379, %v321
        %v1381 = vpop.permute.xlu0 %1380
        %1384 = vset.pattern.permute.xlu0 0
        %1385 = vperm.xlu0 %1384, %v322
        %v1386 = vpop.permute.xlu0 %1385
        %v1388 = vadd.f32 %v1374, %v1381
        %v1389 = vadd.f32 %v1375, %v1381
        %v1390 = vadd.f32 %v1376, %v1386
        %v1391 = vadd.f32 %v1377, %v1386
        %v1392 = vmax.f32 %v1388, 0.0
        %v1393 = vmax.f32 %v1389, 0.0
        %v1394 = vmax.f32 %v1390, 0.0
        %v1395 = vmax.f32 %v1391, 0.0
        %v1396 = vld [vmem:[%s3] sm:$0xff]
        %v1397 = vld [vmem:[%s3 + $0x8] sm:$0xff]
        %v1398 = vld [vmem:[%s3 + $0x10] sm:$0xff]
        %v1399 = vld [vmem:[%s3 + $0x18] sm:$0xff]
        %1401 = vset.pattern.permute.xlu0 0
        %1402 = vperm.xlu0 %1401, %v323
        %v1403 = vpop.permute.xlu0 %1402
        %1406 = vset.pattern.permute.xlu0 0
        %1407 = vperm.xlu0 %1406, %v324
        %v1408 = vpop.permute.xlu0 %1407
        %1411 = vset.pattern.permute.xlu0 0
        %1412 = vperm.xlu0 %1411, %v325
        %v1413 = vpop.permute.xlu0 %1412
        %1416 = vset.pattern.permute.xlu0 0
        %1417 = vperm.xlu0 %1416, %v326
        %v1418 = vpop.permute.xlu0 %1417
        %v1421 = vsel %vm509, %v1396, 0
        %v1424 = vsel %vm509, %v1397, 0
        %v1427 = vsel %vm509, %v1398, 0
        %v1430 = vsel %vm509, %v1399, 0
        %1432 = vmatprep.subr.mxu0 %v1393
        %1433 = vmatpush1.msra.mxu0 %v1392
        %1434 = vmatprep.subr.mxu0 %v1395
        %1435 = vmatpush1.msra.mxu0 %v1394
        %1436 = vmatprep.subr.mxu0 0.0
        %1437 = vmatpush1.msra.mxu0 0.0
        %1438 = vmatprep.subr.mxu0 0.0
        %1439 = vmatpush1.msra.mxu0 0.0
        %1440 = vmatprep.subr.mxu0 0.0
        %1441 = vmatpush1.msra.mxu0 0.0
        %1442 = vmatprep.subr.mxu0 0.0
        %1443 = vmatpush1.msra.mxu0 0.0
        %1444 = vmatprep.subr.mxu0 0.0
        %1445 = vmatpush1.msra.mxu0 0.0
        %1446 = vmatprep.subr.mxu0 0.0
        %1447 = vmatpush1.msra.mxu0 0.0
        %1448 = vmatprep.subr.mxu0 0.0
        %1449 = vmatpush1.msra.mxu0 0.0
        %1450 = vmatprep.subr.mxu0 0.0
        %1451 = vmatpush1.msra.mxu0 0.0
        %1452 = vmatprep.subr.mxu0 0.0
        %1453 = vmatpush1.msra.mxu0 0.0
        %1454 = vmatprep.subr.mxu0 0.0
        %1455 = vmatpush1.msra.mxu0 0.0
        %1456 = vmatprep.subr.mxu0 0.0
        %1457 = vmatpush1.msra.mxu0 0.0
        %1458 = vmatprep.subr.mxu0 0.0
        %1459 = vmatpush1.msra.mxu0 0.0
        %1460 = vmatprep.subr.mxu0 0.0
        %1461 = vmatpush1.msra.mxu0 0.0
        %1462 = vmatprep.subr.mxu0 0.0
        %1463 = vmatpush1.msra.mxu0 0.0
        %1464 = vmatprep.subr.mxu0 0.0
        %1465 = vmatpush1.msra.mxu0 0.0
        %1466 = vmatprep.subr.mxu0 0.0
        %1467 = vmatpush1.msra.mxu0 0.0
        %1468 = vmatprep.subr.mxu0 0.0
        %1469 = vmatpush1.msra.mxu0 0.0
        %1470 = vmatprep.subr.mxu0 0.0
        %1471 = vmatpush1.msra.mxu0 0.0
        %1472 = vmatprep.subr.mxu0 0.0
        %1473 = vmatpush1.msra.mxu0 0.0
        %1474 = vmatprep.subr.mxu0 0.0
        %1475 = vmatpush1.msra.mxu0 0.0
        %1476 = vmatprep.subr.mxu0 0.0
        %1477 = vmatpush1.msra.mxu0 0.0
        %1478 = vmatprep.subr.mxu0 0.0
        %1479 = vmatpush1.msra.mxu0 0.0
        %1480 = vmatprep.subr.mxu0 0.0
        %1481 = vmatpush1.msra.mxu0 0.0
        %1482 = vmatprep.subr.mxu0 0.0
        %1483 = vmatpush1.msra.mxu0 0.0
        %1484 = vmatprep.subr.mxu0 0.0
        %1485 = vmatpush1.msra.mxu0 0.0
        %1486 = vmatprep.subr.mxu0 0.0
        %1487 = vmatpush1.msra.mxu0 0.0
        %1488 = vmatprep.subr.mxu0 0.0
        %1489 = vmatpush1.msra.mxu0 0.0
        %1490 = vmatprep.subr.mxu0 0.0
        %1491 = vmatpush1.msra.mxu0 0.0
        %1492 = vmatprep.subr.mxu0 0.0
        %1493 = vmatpush1.msra.mxu0 0.0
        %1494 = vmatprep.subr.mxu0 0.0
        %1495 = vmatpush1.msra.mxu0 0.0
        %1496 = vmatprep.mubr.f32.mxu0 0.0
        %1497 = vmatmul.mubr.f32.gmra.mrb[0].mxu0 %v1421
        %v1498 = vpop.f32.mrb[0].mxu0
        %v1499 = vadd.f32 %v1403, %v1498
        %v1500 = vpop.f32.mrb[0].mxu0
        %v1501 = vadd.f32 %v1403, %v1500
        %1502 = vmatprep.mubr.f32.mxu0 0.0
        %1503 = vmatmul.mubr.f32.gmra.mrb[0].mxu0 %v1424
        %v1504 = vpop.f32.mrb[0].mxu0
        %v1505 = vadd.f32 %v1408, %v1504
        %v1506 = vpop.f32.mrb[0].mxu0
        %v1507 = vadd.f32 %v1408, %v1506
        %1508 = vmatprep.mubr.f32.mxu0 0.0
        %1509 = vmatmul.mubr.f32.gmra.mrb[0].mxu0 %v1427
        %v1510 = vpop.f32.mrb[0].mxu0
        %v1511 = vadd.f32 %v1413, %v1510
        %v1512 = vpop.f32.mrb[0].mxu0
        %v1513 = vadd.f32 %v1413, %v1512
        %1514 = vmatprep.mubr.f32.mxu0 0.0
        %1515 = vmatmul.mubr.f32.gmra.mrb[0].mxu0 %v1430
        %v1516 = vpop.f32.mrb[0].mxu0
        %v1517 = vadd.f32 %v1418, %v1516
        %v1518 = vpop.f32.mrb[0].mxu0
        %v1519 = vadd.f32 %v1418, %v1518
        %1520 = vdwg.mxu0
        %v1521 = vld [vmem:[%s6] sm:$0xff]
        %v1522 = vld [vmem:[%s6 + $0x8] sm:$0xff]
        %v1523 = vld [vmem:[%s6 + $0x10] sm:$0xff]
        %v1524 = vld [vmem:[%s6 + $0x18] sm:$0xff]
        %v1525 = vadd.f32 %v1499, %v1501
        %1526 = vadd.xlane.f32.xlu0 %v1525
        %v1527 = vpop.xlane.xlu0 %1526
        %v1528 = vadd.f32 %v1505, %v1507
        %1529 = vadd.xlane.f32.xlu0 %v1528
        %v1530 = vpop.xlane.xlu0 %1529
        %v1531 = vadd.f32 %v1511, %v1513
        %1532 = vadd.xlane.f32.xlu0 %v1531
        %v1533 = vpop.xlane.xlu0 %1532
        %v1534 = vadd.f32 %v1517, %v1519
        %1535 = vadd.xlane.f32.xlu0 %v1534
        %v1536 = vpop.xlane.xlu0 %1535
        %vm1537 = vcmask 261120
        %v1539 = vsel %vm1537, %v1521, 0
        %v1542 = vsel %vm1537, %v1522, 0
        %v1545 = vsel %vm1537, %v1523, 0
        %v1548 = vsel %vm1537, %v1524, 0
        %1550 = vmatprep.subr.mxu0 0.0
        %1551 = vmatpush1.msra.mxu0 %v1527
        %1552 = vmatprep.subr.mxu0 0.0
        %1553 = vmatpush1.msra.mxu0 %v1530
        %1554 = vmatprep.subr.mxu0 0.0
        %1555 = vmatpush1.msra.mxu0 %v1533
        %1556 = vmatprep.subr.mxu0 0.0
        %1557 = vmatpush1.msra.mxu0 %v1536
        %1558 = vmatprep.subr.mxu0 0.0
        %1559 = vmatpush1.msra.mxu0 0.0
        %1560 = vmatprep.subr.mxu0 0.0
        %1561 = vmatpush1.msra.mxu0 0.0
        %1562 = vmatprep.subr.mxu0 0.0
        %1563 = vmatpush1.msra.mxu0 0.0
        %1564 = vmatprep.subr.mxu0 0.0
        %1565 = vmatpush1.msra.mxu0 0.0
        %1566 = vmatprep.subr.mxu0 0.0
        %1567 = vmatpush1.msra.mxu0 0.0
        %1568 = vmatprep.subr.mxu0 0.0
        %1569 = vmatpush1.msra.mxu0 0.0
        %1570 = vmatprep.subr.mxu0 0.0
        %1571 = vmatpush1.msra.mxu0 0.0
        %1572 = vmatprep.subr.mxu0 0.0
        %1573 = vmatpush1.msra.mxu0 0.0
        %1574 = vmatprep.subr.mxu0 0.0
        %1575 = vmatpush1.msra.mxu0 0.0
        %1576 = vmatprep.subr.mxu0 0.0
        %1577 = vmatpush1.msra.mxu0 0.0
        %1578 = vmatprep.subr.mxu0 0.0
        %1579 = vmatpush1.msra.mxu0 0.0
        %1580 = vmatprep.subr.mxu0 0.0
        %1581 = vmatpush1.msra.mxu0 0.0
        %1582 = vmatprep.subr.mxu0 0.0
        %1583 = vmatpush1.msra.mxu0 0.0
        %1584 = vmatprep.subr.mxu0 0.0
        %1585 = vmatpush1.msra.mxu0 0.0
        %1586 = vmatprep.subr.mxu0 0.0
        %1587 = vmatpush1.msra.mxu0 0.0
        %1588 = vmatprep.subr.mxu0 0.0
        %1589 = vmatpush1.msra.mxu0 0.0
        %1590 = vmatprep.subr.mxu0 0.0
        %1591 = vmatpush1.msra.mxu0 0.0
        %1592 = vmatprep.subr.mxu0 0.0
        %1593 = vmatpush1.msra.mxu0 0.0
        %1594 = vmatprep.subr.mxu0 0.0
        %1595 = vmatpush1.msra.mxu0 0.0
        %1596 = vmatprep.subr.mxu0 0.0
        %1597 = vmatpush1.msra.mxu0 0.0
        %1598 = vmatprep.subr.mxu0 0.0
        %1599 = vmatpush1.msra.mxu0 0.0
        %1600 = vmatprep.subr.mxu0 0.0
        %1601 = vmatpush1.msra.mxu0 0.0
        %1602 = vmatprep.subr.mxu0 0.0
        %1603 = vmatpush1.msra.mxu0 0.0
        %1604 = vmatprep.subr.mxu0 0.0
        %1605 = vmatpush1.msra.mxu0 0.0
        %1606 = vmatprep.subr.mxu0 0.0
        %1607 = vmatpush1.msra.mxu0 0.0
        %1608 = vmatprep.subr.mxu0 0.0
        %1609 = vmatpush1.msra.mxu0 0.0
        %1610 = vmatprep.subr.mxu0 0.0
        %1611 = vmatpush1.msra.mxu0 0.0
        %1612 = vmatprep.subr.mxu0 0.0
        %1613 = vmatpush1.msra.mxu0 0.0
        %1614 = vmatprep.mubr.f32.mxu0 0.0
        %1615 = vmatmul.mubr.f32.gmra.mrb[0].mxu0 %v1539
        %v1616 = vpop.f32.mrb[0].mxu0
        %v1617 = vadd.f32 0.0, %v1616
        %v1618 = vpop.f32.mrb[0].mxu0
        %1619 = vmatprep.mubr.f32.mxu0 0.0
        %1620 = vmatmul.mubr.f32.gmra.mrb[0].mxu0 %v1542
        %v1621 = vpop.f32.mrb[0].mxu0
        %v1622 = vadd.f32 0.0, %v1621
        %v1623 = vpop.f32.mrb[0].mxu0
        %1624 = vmatprep.mubr.f32.mxu0 0.0
        %1625 = vmatmul.mubr.f32.gmra.mrb[0].mxu0 %v1545
        %v1626 = vpop.f32.mrb[0].mxu0
        %v1627 = vadd.f32 0.0, %v1626
        %v1628 = vpop.f32.mrb[0].mxu0
        %1629 = vmatprep.mubr.f32.mxu0 0.0
        %1630 = vmatmul.mubr.f32.gmra.mrb[0].mxu0 %v1548
        %v1631 = vpop.f32.mrb[0].mxu0
        %v1632 = vadd.f32 0.0, %v1631
        %v1633 = vpop.f32.mrb[0].mxu0
        %1634 = vdwg.mxu0
        %v1635 = vmul.f32 %v1617, 0.00048828125
        %v1636 = vmul.f32 %v1622, 0.00048828125
        %v1637 = vmul.f32 %v1627, 0.00048828125
        %v1638 = vmul.f32 %v1632, 0.00048828125
        %1640 = vset.pattern.permute.xlu0 0
        %1641 = vperm.xlu0 %1640, %v1635
        %v1642 = vpop.permute.xlu0 %1641
        %1645 = vset.pattern.permute.xlu0 0
        %1646 = vperm.xlu0 %1645, %v1636
        %v1647 = vpop.permute.xlu0 %1646
        %1650 = vset.pattern.permute.xlu0 0
        %1651 = vperm.xlu0 %1650, %v1637
        %v1652 = vpop.permute.xlu0 %1651
        %1655 = vset.pattern.permute.xlu0 0
        %1656 = vperm.xlu0 %1655, %v1638
        %v1657 = vpop.permute.xlu0 %1656
        %v1659 = vsub.f32 %v1499, %v1642
        %v1660 = vsub.f32 %v1501, %v1642
        %v1661 = vsub.f32 %v1505, %v1647
        %v1662 = vsub.f32 %v1507, %v1647
        %v1663 = vsub.f32 %v1511, %v1652
        %v1664 = vsub.f32 %v1513, %v1652
        %v1665 = vsub.f32 %v1517, %v1657
        %v1666 = vsub.f32 %v1519, %v1657
        %v1667 = vmul.f32 %v1659, %v1659
        %v1668 = vmul.f32 %v1660, %v1660
        %v1669 = vmul.f32 %v1661, %v1661
        %v1670 = vmul.f32 %v1662, %v1662
        %v1671 = vmul.f32 %v1663, %v1663
        %v1672 = vmul.f32 %v1664, %v1664
        %v1673 = vmul.f32 %v1665, %v1665
        %v1674 = vmul.f32 %v1666, %v1666
        %v1675 = vadd.f32 %v1667, %v1668
        %1676 = vadd.xlane.f32.xlu0 %v1675
        %v1677 = vpop.xlane.xlu0 %1676
        %v1678 = vadd.f32 %v1669, %v1670
        %1679 = vadd.xlane.f32.xlu0 %v1678
        %v1680 = vpop.xlane.xlu0 %1679
        %v1681 = vadd.f32 %v1671, %v1672
        %1682 = vadd.xlane.f32.xlu0 %v1681
        %v1683 = vpop.xlane.xlu0 %1682
        %v1684 = vadd.f32 %v1673, %v1674
        %1685 = vadd.xlane.f32.xlu0 %v1684
        %v1686 = vpop.xlane.xlu0 %1685
        %1687 = vmatprep.subr.mxu0 0.0
        %1688 = vmatpush1.msra.mxu0 %v1677
        %1689 = vmatprep.subr.mxu0 0.0
        %1690 = vmatpush1.msra.mxu0 %v1680
        %1691 = vmatprep.subr.mxu0 0.0
        %1692 = vmatpush1.msra.mxu0 %v1683
        %1693 = vmatprep.subr.mxu0 0.0
        %1694 = vmatpush1.msra.mxu0 %v1686
        %1695 = vmatprep.subr.mxu0 0.0
        %1696 = vmatpush1.msra.mxu0 0.0
        %1697 = vmatprep.subr.mxu0 0.0
        %1698 = vmatpush1.msra.mxu0 0.0
        %1699 = vmatprep.subr.mxu0 0.0
        %1700 = vmatpush1.msra.mxu0 0.0
        %1701 = vmatprep.subr.mxu0 0.0
        %1702 = vmatpush1.msra.mxu0 0.0
        %1703 = vmatprep.subr.mxu0 0.0
        %1704 = vmatpush1.msra.mxu0 0.0
        %1705 = vmatprep.subr.mxu0 0.0
        %1706 = vmatpush1.msra.mxu0 0.0
        %1707 = vmatprep.subr.mxu0 0.0
        %1708 = vmatpush1.msra.mxu0 0.0
        %1709 = vmatprep.subr.mxu0 0.0
        %1710 = vmatpush1.msra.mxu0 0.0
        %1711 = vmatprep.subr.mxu0 0.0
        %1712 = vmatpush1.msra.mxu0 0.0
        %1713 = vmatprep.subr.mxu0 0.0
        %1714 = vmatpush1.msra.mxu0 0.0
        %1715 = vmatprep.subr.mxu0 0.0
        %1716 = vmatpush1.msra.mxu0 0.0
        %1717 = vmatprep.subr.mxu0 0.0
        %1718 = vmatpush1.msra.mxu0 0.0
        %1719 = vmatprep.subr.mxu0 0.0
        %1720 = vmatpush1.msra.mxu0 0.0
        %1721 = vmatprep.subr.mxu0 0.0
        %1722 = vmatpush1.msra.mxu0 0.0
        %1723 = vmatprep.subr.mxu0 0.0
        %1724 = vmatpush1.msra.mxu0 0.0
        %1725 = vmatprep.subr.mxu0 0.0
        %1726 = vmatpush1.msra.mxu0 0.0
        %1727 = vmatprep.subr.mxu0 0.0
        %1728 = vmatpush1.msra.mxu0 0.0
        %1729 = vmatprep.subr.mxu0 0.0
        %1730 = vmatpush1.msra.mxu0 0.0
        %1731 = vmatprep.subr.mxu0 0.0
        %1732 = vmatpush1.msra.mxu0 0.0
        %1733 = vmatprep.subr.mxu0 0.0
        %1734 = vmatpush1.msra.mxu0 0.0
        %1735 = vmatprep.subr.mxu0 0.0
        %1736 = vmatpush1.msra.mxu0 0.0
        %1737 = vmatprep.subr.mxu0 0.0
        %1738 = vmatpush1.msra.mxu0 0.0
        %1739 = vmatprep.subr.mxu0 0.0
        %1740 = vmatpush1.msra.mxu0 0.0
        %1741 = vmatprep.subr.mxu0 0.0
        %1742 = vmatpush1.msra.mxu0 0.0
        %1743 = vmatprep.subr.mxu0 0.0
        %1744 = vmatpush1.msra.mxu0 0.0
        %1745 = vmatprep.subr.mxu0 0.0
        %1746 = vmatpush1.msra.mxu0 0.0
        %1747 = vmatprep.subr.mxu0 0.0
        %1748 = vmatpush1.msra.mxu0 0.0
        %1749 = vmatprep.subr.mxu0 0.0
        %1750 = vmatpush1.msra.mxu0 0.0
        %1751 = vmatprep.mubr.f32.mxu0 0.0
        %1752 = vmatmul.mubr.f32.gmra.mrb[0].mxu0 %v1539
        %v1753 = vpop.f32.mrb[0].mxu0
        %v1754 = vadd.f32 0.0, %v1753
        %v1755 = vpop.f32.mrb[0].mxu0
        %1756 = vmatprep.mubr.f32.mxu0 0.0
        %1757 = vmatmul.mubr.f32.gmra.mrb[0].mxu0 %v1542
        %v1758 = vpop.f32.mrb[0].mxu0
        %v1759 = vadd.f32 0.0, %v1758
        %v1760 = vpop.f32.mrb[0].mxu0
        %1761 = vmatprep.mubr.f32.mxu0 0.0
        %1762 = vmatmul.mubr.f32.gmra.mrb[0].mxu0 %v1545
        %v1763 = vpop.f32.mrb[0].mxu0
        %v1764 = vadd.f32 0.0, %v1763
        %v1765 = vpop.f32.mrb[0].mxu0
        %1766 = vmatprep.mubr.f32.mxu0 0.0
        %1767 = vmatmul.mubr.f32.gmra.mrb[0].mxu0 %v1548
        %v1768 = vpop.f32.mrb[0].mxu0
        %v1769 = vadd.f32 0.0, %v1768
        %v1770 = vpop.f32.mrb[0].mxu0
        %1771 = vdwg.mxu0
        %v1772 = vmul.f32 %v1754, 0.00048828125
        %v1773 = vmul.f32 %v1759, 0.00048828125
        %v1774 = vmul.f32 %v1764, 0.00048828125
        %v1775 = vmul.f32 %v1769, 0.00048828125
        %v1776 = vadd.f32 %v1772, 1e-05
        %v1777 = vadd.f32 %v1773, 1e-05
        %v1778 = vadd.f32 %v1774, 1e-05
        %v1779 = vadd.f32 %v1775, 1e-05
        %v1780 = vrsqrt.pop %v1776
        %v1781 = vrsqrt.pop %v1777
        %v1782 = vrsqrt.pop %v1778
        %v1783 = vrsqrt.pop %v1779
        %1785 = vset.pattern.permute.xlu0 0
        %1786 = vperm.xlu0 %1785, %v1780
        %v1787 = vpop.permute.xlu0 %1786
        %1790 = vset.pattern.permute.xlu0 0
        %1791 = vperm.xlu0 %1790, %v1781
        %v1792 = vpop.permute.xlu0 %1791
        %1795 = vset.pattern.permute.xlu0 0
        %1796 = vperm.xlu0 %1795, %v1782
        %v1797 = vpop.permute.xlu0 %1796
        %1800 = vset.pattern.permute.xlu0 0
        %1801 = vperm.xlu0 %1800, %v1783
        %v1802 = vpop.permute.xlu0 %1801
        %v1804 = vmul.f32 %v1659, %v1787
        %v1805 = vmul.f32 %v1660, %v1787
        %v1806 = vmul.f32 %v1661, %v1792
        %v1807 = vmul.f32 %v1662, %v1792
        %v1808 = vmul.f32 %v1663, %v1797
        %v1809 = vmul.f32 %v1664, %v1797
        %v1810 = vmul.f32 %v1665, %v1802
        %v1811 = vmul.f32 %v1666, %v1802
        %1813 = vset.pattern.permute.xlu0 0
        %1814 = vperm.xlu0 %1813, %v327
        %v1815 = vpop.permute.xlu0 %1814
        %1818 = vset.pattern.permute.xlu0 0
        %1819 = vperm.xlu0 %1818, %v328
        %v1820 = vpop.permute.xlu0 %1819
        %1823 = vset.pattern.permute.xlu0 0
        %1824 = vperm.xlu0 %1823, %v329
        %v1825 = vpop.permute.xlu0 %1824
        %1828 = vset.pattern.permute.xlu0 0
        %1829 = vperm.xlu0 %1828, %v330
        %v1830 = vpop.permute.xlu0 %1829
        %v1832 = vmul.f32 %v1804, %v1815
        %v1833 = vmul.f32 %v1805, %v1815
        %v1834 = vmul.f32 %v1806, %v1820
        %v1835 = vmul.f32 %v1807, %v1820
        %v1836 = vmul.f32 %v1808, %v1825
        %v1837 = vmul.f32 %v1809, %v1825
        %v1838 = vmul.f32 %v1810, %v1830
        %v1839 = vmul.f32 %v1811, %v1830
        %1841 = vset.pattern.permute.xlu0 0
        %1842 = vperm.xlu0 %1841, %v331
        %v1843 = vpop.permute.xlu0 %1842
        %1846 = vset.pattern.permute.xlu0 0
        %1847 = vperm.xlu0 %1846, %v332
        %v1848 = vpop.permute.xlu0 %1847
        %1851 = vset.pattern.permute.xlu0 0
        %1852 = vperm.xlu0 %1851, %v333
        %v1853 = vpop.permute.xlu0 %1852
        %1856 = vset.pattern.permute.xlu0 0
        %1857 = vperm.xlu0 %1856, %v334
        %v1858 = vpop.permute.xlu0 %1857
        %v1860 = vadd.f32 %v1832, %v1843
        %v1861 = vadd.f32 %v1833, %v1843
        %v1862 = vadd.f32 %v1834, %v1848
        %v1863 = vadd.f32 %v1835, %v1848
        %v1864 = vadd.f32 %v1836, %v1853
        %v1865 = vadd.f32 %v1837, %v1853
        %v1866 = vadd.f32 %v1838, %v1858
        %v1867 = vadd.f32 %v1839, %v1858
        %v1868 = vld [vmem:[%s299] sm:$0xff]
        %v1869 = vld [vmem:[%s299 + $0x8] sm:$0xff]
        %v1870 = vld [vmem:[%s299 + $0x10] sm:$0xff]
        %v1871 = vld [vmem:[%s299 + $0x18] sm:$0xff]
        %v1872 = vld [vmem:[%s299 + $0x20] sm:$0xff]
        %v1873 = vld [vmem:[%s299 + $0x28] sm:$0xff]
        %v1874 = vld [vmem:[%s299 + $0x30] sm:$0xff]
        %v1875 = vld [vmem:[%s299 + $0x38] sm:$0xff]
        %v1876 = vadd.f32 %v1860, %v1868
        %v1877 = vadd.f32 %v1861, %v1869
        %v1878 = vadd.f32 %v1862, %v1870
        %v1879 = vadd.f32 %v1863, %v1871
        %v1880 = vadd.f32 %v1864, %v1872
        %v1881 = vadd.f32 %v1865, %v1873
        %v1882 = vadd.f32 %v1866, %v1874
        %v1883 = vadd.f32 %v1867, %v1875
        %v1884 = vmax.f32 %v1876, 0.0
        %v1885 = vmax.f32 %v1877, 0.0
        %v1886 = vmax.f32 %v1878, 0.0
        %v1887 = vmax.f32 %v1879, 0.0
        %v1888 = vmax.f32 %v1880, 0.0
        %v1889 = vmax.f32 %v1881, 0.0
        %v1890 = vmax.f32 %v1882, 0.0
        %v1891 = vmax.f32 %v1883, 0.0
        %1892 = vst [vmem:[%s299] sm:$0xff] %v1884
        %1893 = vst [vmem:[%s299 + $0x8] sm:$0xff] %v1885
        %1894 = vst [vmem:[%s299 + $0x10] sm:$0xff] %v1886
        %1895 = vst [vmem:[%s299 + $0x18] sm:$0xff] %v1887
        %1896 = vst [vmem:[%s299 + $0x20] sm:$0xff] %v1888
        %1897 = vst [vmem:[%s299 + $0x28] sm:$0xff] %v1889
        %1898 = vst [vmem:[%s299 + $0x30] sm:$0xff] %v1890
        %1899 = vst [vmem:[%s299 + $0x38] sm:$0xff] %v1891
        %s1900 = sand.u32 %s203, 1
        %s1901 = scalar_lea.sflag [#allocation4], %s1900
        %s1902 = sand.u32 %s203, 1
        %s1903 = smul.addr %s1902, 64
        %s1904 = scalar_lea.vmem [#allocation3], %s1903
        // Predicated region
        $region53: #{tpu_custom_call.1} parent=51 // pred_check
          %p1905 = pneg %p213
        $region54: #{tpu_custom_call.1} parent=51 // pred_check_branch
          %1907 = sbr.rel (%p1905) target = $region56
        $region55: #{tpu_custom_call.1} parent=51 // pred_region
          %s1908 = smul.u32 2, %s22
          %s1910 = ssub.s32 1024, 1024
          %1911 = vsyncadd %s1901, %s1910
          %s1912 = smul.addr %s1908, 128
          %s1913 = scalar_lea.hbm %s8, %s1912
          %s1914 = sshll.u32 %s1904, 4
          %s1915 = int_to_ptr.vmem [resolvable:$true] %s1914
          %1920 = dma.vmem_to_hbm [thread:$0]  %s1915, 1024, %s1913, %s1901, 256, 512, 16
        $region56: #{tpu_custom_call.1} parent=51 // pred_fallthru
          _
      $region52: #{tpu_custom_call.1} parent=5 // pred_fallthru
        _
      %p1921 = scmp.le.s32.totalorder 2, %s17
      // Predicated region
      $region57: #{tpu_custom_call.1} parent=5 // pred_check
        %p1922 = pneg %p1921
      $region58: #{tpu_custom_call.1} parent=5 // pred_check_branch
        %1924 = sbr.rel (%p1922) target = $region60
      $region59: #{tpu_custom_call.1} parent=5 // pred_region
        %s1925 = ssub.s32 %s17, 2
        // Predicated region
        $region61: #{tpu_custom_call.1} parent=59 // pred_check
          %p1926 = pneg %p219
        $region62: #{tpu_custom_call.1} parent=59 // pred_check_branch
          %1928 = sbr.rel (%p1926) target = $region64
        $region63: #{tpu_custom_call.1} parent=59 // pred_region
          %s1929 = sand.u32 %s204, 1
          %s1930 = scalar_lea.sflag [#allocation4], %s1929
          %s1931 = sand.u32 %s204, 1
          %s1932 = smul.addr %s1931, 64
          %s1933 = scalar_lea.vmem [#allocation3], %s1932
          %1934 = dma.done %s1930, 1024
        $region64: #{tpu_custom_call.1} parent=59 // pred_fallthru
          _
      $region60: #{tpu_custom_call.1} parent=5 // pred_fallthru
        _
    $region6: #{tpu_custom_call.1} parent=1 // loop_footer
      %s21 = sadd.s32 1, %s17
    $region7: #{tpu_custom_call.1} parent=1 // loop_footer_branch
      %16 = sbr.rel target = $region3
    $region8: #{tpu_custom_call.1} parent=1 // loop_exit
      _
    %1935 = vsyncpa [#allocation4], 1
    %s1936 = scalar_lea.sflag [#allocation4], 1
    %1937 = vsyncpa %s1936, 1

</llo_original>
